<compile_context>
chip_gen: v7x
topology: tpu7x:2x2x1
jax: 0.10.0
libtpu: 0.0.40
codegen_flags: <defaults>
</compile_context>

<pallas_src>
import functools

import jax
import jax.numpy as jnp
import numpy as np
from jax.experimental import pallas as pl
from jax.experimental.pallas import tpu as pltpu


def _round_up(x, m):
    return (x + m - 1) // m * m


def _pad_to(a, shape):
    return jnp.pad(a, [(0, s - d) for d, s in zip(a.shape, shape)])


def _pack_gates(a, h, gp):
    """(..., 3h) in PyTorch gate order [r|z|n] -> (..., gp) packed [z|n|r] at stride h.

    The [z|n|r] order needs only two lane-rolls per recurrence step (both by gp-h):
    r (lane 2h) -> the n slot (lane h) for the n-gate product, then n -> lane 0
    (h's home, shared with z) for the final blend.
    """
    r = a[..., 0 * h:1 * h]
    z = a[..., 1 * h:2 * h]
    n = a[..., 2 * h:3 * h]
    packed = jnp.concatenate([z, n, r], axis=-1)
    return _pad_to(packed, packed.shape[:-1] + (gp,))


def _gru_kernel(x_ref, len_ref, init_ref,
                w_init_ref, b_init_ref,
                w_ih_ref, bias_x_ref,
                w_hh_ref, b_hn_ref,
                out_ref, gx_ref, *, hidden):
    T, Bt, D = x_ref.shape
    Gp = out_ref.shape[1]
    shift = Gp - hidden            # static lane rotation: moves a gate "down" by H lanes
    unroll = True if T <= 16 else 8

    # ---- initial hidden state: h0 = sigmoid(init_input @ W_init + b_init) ----
    # Real data in lanes [0:H); padded lanes hold sigmoid(0)=0.5 and never reach the
    # output (w_hh's padded rows are exactly zero and the wrapper slices [:, :H]).
    h0 = jax.nn.sigmoid(
        jnp.dot(init_ref[...], w_init_ref[...], preferred_element_type=jnp.float32)
        + b_init_ref[...])                                        # (Bt, Gp) f32

    # ---- input projections for every timestep in ONE pass (no per-t loop) ----
    # (T, Bt, D) -> (T*Bt, D) is layout-free because Bt is a sublane multiple.
    x2 = x_ref[...].reshape(T * Bt, D)
    if D == 1:
        # K=1 contraction is a rank-1 update: do it on the VPU, keep the MXU free.
        gx = x2.astype(jnp.float32) * w_ih_ref[...].astype(jnp.float32)
    else:
        gx = jnp.dot(x2, w_ih_ref[...], preferred_element_type=jnp.float32)
    # bias (b_ih + folded b_hh_{r,z}) added once; (1, Gp) sublane-broadcast is implicit.
    gx_ref[...] = (gx + bias_x_ref[...]).reshape(T, Bt, Gp)

    # ---- serial recurrence over T (the critical path) ----
    w_hh = w_hh_ref[...]                                          # (Gp, Gp) bf16
    b_hn = b_hn_ref[...]                                          # (1, Gp): b_hh_n @ n slot
    lens = len_ref[...]                                           # (Bt, 1) int32

    def step(t, h):
        gx_t = gx_ref[t]                                          # (Bt, Gp) addressed load
        gh = jnp.dot(h.astype(w_hh.dtype), w_hh,
                     preferred_element_type=jnp.float32)          # (Bt, Gp), one MXU tile
        sg = jax.nn.sigmoid(gx_t + gh)                            # z @ 0, r @ 2H
        r_n = pltpu.roll(sg, shift, axis=1)                       # r -> n slot (@ H)
        n_t = jnp.tanh(gx_t + r_n * (gh + b_hn))                  # n @ H
        n_0 = pltpu.roll(n_t, shift, axis=1)                      # n -> lane 0 (h's home)
        h_new = (1.0 - sg) * n_0 + sg * h                         # valid in lanes [0:H)
        return jnp.where(lens > t, h_new, h)                      # freeze past seq end

    out_ref[...] = jax.lax.fori_loop(0, T, step, h0, unroll=unroll)


def sequence_rnn_forward(timeseries_features, tensor_size, init_input, params, *,
                         b_tile=32):
    """params (pre-transposed, PyTorch gate order [r|z|n]):
         w_init (D_init, H), b_init (1, H)
         w_ih   (D_in, 3H),  b_ih   (1, 3H)
         w_hh   (H, 3H),     b_hh   (1, 3H)
    """
    x = jnp.asarray(timeseries_features, jnp.float32)
    init_x = jnp.asarray(init_input, jnp.float32)
    lens = jnp.asarray(tensor_size, jnp.int32).reshape(-1)

    B, T, D = x.shape
    D_init = init_x.shape[-1]
    H = params["w_hh"].shape[0]

    # ---- lane / sublane padding & tiling ----
    Gp = _round_up(3 * H, 128)          # packed gate width == padded hidden lane width
    Dip = _round_up(D_init, 128)
    if B >= 16:
        bt_cap = _round_up(-(-B // 2), 8)   # >= 2 batch tiles so both v7x TCs get work
    else:
        bt_cap = _round_up(B, 8)
    bt = max(8, min(_round_up(b_tile, 8), bt_cap))   # vreg-pressure cap ~32
    Bp = _round_up(B, bt)

    bf16 = jnp.bfloat16

    # Weights as bf16 MXU operands; biases stay f32 (post-accumulation adds).
    w_init_p = _pad_to(params["w_init"], (Dip, Gp)).astype(bf16)       # h home: lanes [0:H)
    b_init_p = _pad_to(params["b_init"], (1, Gp)).astype(jnp.float32)
    w_ih_p = _pack_gates(params["w_ih"], H, Gp).astype(bf16)           # (D, Gp)
    w_hh_p = _pad_to(_pack_gates(params["w_hh"], H, Gp), (Gp, Gp)).astype(bf16)
    # Fold the r/z recurrent biases into the precomputed input-projection bias; only the
    # n-gate recurrent bias must remain inside r*(...) at every step.
    b_ih, b_hh = params["b_ih"], params["b_hh"]
    bias_x_p = _pack_gates(
        b_ih + jnp.concatenate([b_hh[:, :2 * H],
                                jnp.zeros((1, H), b_hh.dtype)], axis=-1),
        H, Gp).astype(jnp.float32)                                     # (1, Gp)
    b_hn_p = _pack_gates(
        jnp.concatenate([jnp.zeros((1, 2 * H), b_hh.dtype), b_hh[:, 2 * H:]], axis=-1),
        H, Gp).astype(jnp.float32)                                     # (1, Gp): n slot only

    # Activations: batch-pad, time-major (XLA transposes outside the kernel), bf16.
    x_tm = jnp.transpose(_pad_to(x, (Bp, T, D)), (1, 0, 2)).astype(bf16)   # (T, Bp, D)
    init_p = _pad_to(init_x, (Bp, Dip)).astype(bf16)                       # (Bp, Dip)
    lens_c = _pad_to(lens, (Bp,))[:, None].astype(jnp.int32)               # (Bp, 1)

    # ---- VMEM budget (padded block footprints, double-buffered inputs) ----
    def blk_bytes(shape, dtype):
        s = list(shape)
        s[-1] = _round_up(s[-1], 128)
        if len(s) >= 2:
            s[-2] = _round_up(s[-2], 8)
        return int(np.prod(s)) * jnp.dtype(dtype).itemsize

    in_blocks = [((T, bt, D), bf16), ((bt, 1), jnp.int32), ((bt, Dip), bf16),
                 ((Dip, Gp), bf16), ((1, Gp), jnp.float32), ((D, Gp), bf16),
                 ((1, Gp), jnp.float32), ((Gp, Gp), bf16), ((1, Gp), jnp.float32)]
    vmem_needed = (2 * sum(blk_bytes(s, d) for s, d in in_blocks)
                   + 2 * blk_bytes((bt, Gp), jnp.float32)            # output block
                   + blk_bytes((T, bt, Gp), jnp.float32))            # gx scratch
    vmem_limit = int(min(max(vmem_needed + (8 << 20), 32 << 20), 64 << 20))

    proj_flops = 2 * T * Bp * Gp * (1 if D == 1 else D)
    cost = pl.CostEstimate(
        flops=int(proj_flops + 2 * T * Bp * Gp * Gp + 2 * Bp * Dip * Gp
                  + 12 * T * Bp * Gp),
        transcendentals=int(2 * T * Bp * Gp + Bp * Gp),
        bytes_accessed=int(sum(int(a.size) * a.dtype.itemsize for a in
                               (x_tm, lens_c, init_p, w_init_p, b_init_p,
                                w_ih_p, bias_x_p, w_hh_p, b_hn_p))
                           + Bp * Gp * 4),
    )

    out = pl.pallas_call(
        functools.partial(_gru_kernel, hidden=H),
        out_shape=jax.ShapeDtypeStruct((Bp, Gp), jnp.float32),
        grid_spec=pltpu.PrefetchScalarGridSpec(
            num_scalar_prefetch=0,
            grid=(Bp // bt,),
            in_specs=[
                pl.BlockSpec((T, bt, D), lambda b: (0, b, 0)),      # x (time-major)
                pl.BlockSpec((bt, 1), lambda b: (b, 0)),            # lens (single column)
                pl.BlockSpec((bt, Dip), lambda b: (b, 0)),          # init_input
                pl.BlockSpec((Dip, Gp), lambda b: (0, 0)),          # w_init
                pl.BlockSpec((1, Gp), lambda b: (0, 0)),            # b_init
                pl.BlockSpec((D, Gp), lambda b: (0, 0)),            # w_ih (packed gates)
                pl.BlockSpec((1, Gp), lambda b: (0, 0)),            # bias_x (b_ih+b_hr/hz)
                pl.BlockSpec((Gp, Gp), lambda b: (0, 0)),           # w_hh (packed gates)
                pl.BlockSpec((1, Gp), lambda b: (0, 0)),            # b_hn (n slot only)
            ],
            out_specs=pl.BlockSpec((bt, Gp), lambda b: (b, 0)),
            scratch_shapes=[pltpu.VMEM((T, bt, Gp), jnp.float32)],  # packed gx, time-major
        ),
        compiler_params=pltpu.CompilerParams(
            dimension_semantics=("parallel",),
            vmem_limit_bytes=vmem_limit,
        ),
        cost_estimate=cost,
    )(x_tm, lens_c, init_p, w_init_p, b_init_p, w_ih_p, bias_x_p, w_hh_p, b_hn_p)

    return out[:B, :H]


def _reference(timeseries_features, tensor_size, init_input, params):
    """Plain-JAX reference for the PyTorch module semantics. Matmul operands are cast to
    bf16 (with f32 accumulation) to mirror the kernel's MXU precision."""
    bf16 = jnp.bfloat16
    x = timeseries_features.astype(jnp.float32)
    lens = tensor_size.astype(jnp.int32)
    H = params["w_hh"].shape[0]
    w_init = params["w_init"].astype(bf16)
    w_ih = params["w_ih"].astype(bf16)
    w_hh = params["w_hh"].astype(bf16)

    h = jax.nn.sigmoid(
        jnp.dot(init_input.astype(bf16), w_init, preferred_element_type=jnp.float32)
        + params["b_init"])
    B, T, _ = x.shape
    for t in range(T):
        gx = jnp.dot(x[:, t, :].astype(bf16), w_ih,
                     preferred_element_type=jnp.float32) + params["b_ih"]
        gh = jnp.dot(h.astype(bf16), w_hh,
                     preferred_element_type=jnp.float32) + params["b_hh"]
        r = jax.nn.sigmoid(gx[:, 0 * H:1 * H] + gh[:, 0 * H:1 * H])
        z = jax.nn.sigmoid(gx[:, 1 * H:2 * H] + gh[:, 1 * H:2 * H])
        n = jnp.tanh(gx[:, 2 * H:3 * H] + r * gh[:, 2 * H:3 * H])
        h_new = (1.0 - z) * n + z * h
        h = jnp.where((lens > t)[:, None], h_new, h)
    return h


def make_params(key, init_dim, in_dim, hidden):
    """Deterministic synthetic parameters with PyTorch-like uniform init."""
    ks = jax.random.split(key, 6)
    k_lin = 1.0 / np.sqrt(init_dim)
    k_gru = 1.0 / np.sqrt(hidden)
    u = lambda k, shape, s: jax.random.uniform(k, shape, jnp.float32, -s, s)
    return {
        # Linear(init_dim -> hidden), pre-transposed: (init_dim, hidden)
        "w_init": u(ks[0], (init_dim, hidden), k_lin),
        "b_init": u(ks[1], (1, hidden), k_lin),
        # GRU weight_ih_l0 (3H, in_dim) pre-transposed -> (in_dim, 3H), order [r|z|n]
        "w_ih": u(ks[2], (in_dim, 3 * hidden), k_gru),
        "b_ih": u(ks[3], (1, 3 * hidden), k_gru),
        # GRU weight_hh_l0 (3H, H) pre-transposed -> (H, 3H)
        "w_hh": u(ks[4], (hidden, 3 * hidden), k_gru),
        "b_hh": u(ks[5], (1, 3 * hidden), k_gru),
    }


if __name__ == "__main__":
    B, T = 4, 8
    D_INIT = 16          # initialization_input_dim
    D_IN = 1             # timeseries_input_dim (module default)
    HIDDEN = 20          # timeseries_output_dim (module default)

    key = jax.random.PRNGKey(0)
    k_x, k_init, k_p = jax.random.split(key, 3)

    timeseries_features = jax.random.normal(k_x, (B, T, D_IN), jnp.float32)
    init_input = jax.random.normal(k_init, (B, D_INIT), jnp.float32)
    tensor_size = jnp.array([8, 5, 3, 6], dtype=jnp.int32)   # valid lengths per batch

    params = make_params(k_p, D_INIT, D_IN, HIDDEN)

    out = sequence_rnn_forward(timeseries_features, tensor_size, init_input, params)
    out = jax.block_until_ready(out)

    ref = _reference(timeseries_features, tensor_size, init_input, params)
    np.testing.assert_allclose(np.asarray(out), np.asarray(ref), rtol=5e-3, atol=5e-3)

    print("KERNEL_OK")
</pallas_src>

<mosaic_0001>
module attributes {stable_mosaic.version = 11 : i64} {
  func.func @_gru_kernel(%arg0: i32, %arg1: memref<8x8x1xbf16, #tpu.memory_space<vmem>>, %arg2: memref<8x1xi32, #tpu.memory_space<vmem>>, %arg3: memref<8x128xbf16, #tpu.memory_space<vmem>>, %arg4: memref<128x128xbf16, #tpu.memory_space<vmem>>, %arg5: memref<1x128xf32, #tpu.memory_space<vmem>>, %arg6: memref<1x128xbf16, #tpu.memory_space<vmem>>, %arg7: memref<1x128xf32, #tpu.memory_space<vmem>>, %arg8: memref<128x128xbf16, #tpu.memory_space<vmem>>, %arg9: memref<1x128xf32, #tpu.memory_space<vmem>>, %arg10: memref<8x128xf32, #tpu.memory_space<vmem>>, %arg11: memref<8x8x128xf32, #tpu.memory_space<vmem>>) attributes {dimension_semantics = [#tpu.dimension_semantics<parallel>], iteration_bounds = array<i64: 1>, scalar_prefetch = 0 : i64, scratch_operands = 1 : i64, tpu.core_type = #tpu.core_type<tc>, window_params = [{transform_indices = @transform_0, window_bounds = array<i64: 8, 8, 1>}, {transform_indices = @transform_1, window_bounds = array<i64: 8, 1>}, {transform_indices = @transform_2, window_bounds = array<i64: 8, 128>}, {pipeline_mode = #tpu.pipeline_mode<synchronous>, transform_indices = @transform_3, window_bounds = array<i64: 128, 128>}, {pipeline_mode = #tpu.pipeline_mode<synchronous>, transform_indices = @transform_4, window_bounds = array<i64: 1, 128>}, {pipeline_mode = #tpu.pipeline_mode<synchronous>, transform_indices = @transform_5, window_bounds = array<i64: 1, 128>}, {pipeline_mode = #tpu.pipeline_mode<synchronous>, transform_indices = @transform_6, window_bounds = array<i64: 1, 128>}, {pipeline_mode = #tpu.pipeline_mode<synchronous>, transform_indices = @transform_7, window_bounds = array<i64: 128, 128>}, {pipeline_mode = #tpu.pipeline_mode<synchronous>, transform_indices = @transform_8, window_bounds = array<i64: 1, 128>}, {transform_indices = @transform_9, window_bounds = array<i64: 8, 128>}]} {
    %c0 = arith.constant 0 : index
    %c0_0 = arith.constant 0 : index
    %0 = vector.load %arg3[%c0, %c0_0] : memref<8x128xbf16, #tpu.memory_space<vmem>>, vector<8x128xbf16>
    %c0_1 = arith.constant 0 : index
    %c0_2 = arith.constant 0 : index
    %1 = vector.load %arg4[%c0_1, %c0_2] : memref<128x128xbf16, #tpu.memory_space<vmem>>, vector<128x128xbf16>
    %cst = arith.constant dense<0.000000e+00> : vector<8x128xf32>
    %2 = tpu.matmul %0, %1, %cst {dimension_numbers = #tpu.dot_dimension_numbers<[1], [0], [0], [1], [0, 0, 1, 1], [], []>} : vector<8x128xbf16>, vector<128x128xbf16>, vector<8x128xf32> -> vector<8x128xf32>
    %c0_3 = arith.constant 0 : index
    %c0_4 = arith.constant 0 : index
    %3 = vector.load %arg5[%c0_3, %c0_4] : memref<1x128xf32, #tpu.memory_space<vmem>>, vector<1x128xf32>
    %4 = vector.broadcast %3 : vector<1x128xf32> to vector<8x128xf32>
    %5 = arith.addf %2, %4 : vector<8x128xf32>
    %6 = arith.negf %5 : vector<8x128xf32>
    %7 = math.exp %6 : vector<8x128xf32>
    %cst_5 = arith.constant 1.000000e+00 : f32
    %8 = vector.broadcast %cst_5 : f32 to vector<8x128xf32>
    %9 = arith.addf %8, %7 : vector<8x128xf32>
    %10 = arith.divf %8, %9 : vector<8x128xf32>
    %c0_6 = arith.constant 0 : index
    %c0_7 = arith.constant 0 : index
    %c0_8 = arith.constant 0 : index
    %11 = vector.load %arg1[%c0_6, %c0_7, %c0_8] : memref<8x8x1xbf16, #tpu.memory_space<vmem>>, vector<8x8x1xbf16>
    %12 = vector.shape_cast %11 : vector<8x8x1xbf16> to vector<64x1xbf16>
    %13 = arith.extf %12 : vector<64x1xbf16> to vector<64x1xf32>
    %c0_9 = arith.constant 0 : index
    %c0_10 = arith.constant 0 : index
    %14 = vector.load %arg6[%c0_9, %c0_10] : memref<1x128xbf16, #tpu.memory_space<vmem>>, vector<1x128xbf16>
    %15 = arith.extf %14 : vector<1x128xbf16> to vector<1x128xf32>
    %16 = vector.broadcast %13 : vector<64x1xf32> to vector<64x128xf32>
    %17 = vector.broadcast %15 : vector<1x128xf32> to vector<64x128xf32>
    %18 = arith.mulf %16, %17 : vector<64x128xf32>
    %c0_11 = arith.constant 0 : index
    %c0_12 = arith.constant 0 : index
    %19 = vector.load %arg7[%c0_11, %c0_12] : memref<1x128xf32, #tpu.memory_space<vmem>>, vector<1x128xf32>
    %20 = vector.broadcast %19 : vector<1x128xf32> to vector<64x128xf32>
    %21 = arith.addf %18, %20 : vector<64x128xf32>
    %22 = vector.shape_cast %21 : vector<64x128xf32> to vector<8x8x128xf32>
    %c0_13 = arith.constant 0 : index
    %c0_14 = arith.constant 0 : index
    %c0_15 = arith.constant 0 : index
    %23 = vector.load %arg11[%c0_13, %c0_14, %c0_15] : memref<8x8x128xf32, #tpu.memory_space<vmem>>, vector<8x8x128xf32>
    tpu.vector_store %arg11[%c0_13, %c0_14, %c0_15], %22 {strides = array<i32>} : memref<8x8x128xf32, #tpu.memory_space<vmem>>, vector<8x8x128xf32>,
    %c0_16 = arith.constant 0 : index
    %c0_17 = arith.constant 0 : index
    %24 = vector.load %arg8[%c0_16, %c0_17] : memref<128x128xbf16, #tpu.memory_space<vmem>>, vector<128x128xbf16>
    %c0_18 = arith.constant 0 : index
    %c0_19 = arith.constant 0 : index
    %25 = vector.load %arg9[%c0_18, %c0_19] : memref<1x128xf32, #tpu.memory_space<vmem>>, vector<1x128xf32>
    %c0_20 = arith.constant 0 : index
    %c0_21 = arith.constant 0 : index
    %26 = vector.load %arg2[%c0_20, %c0_21] : memref<8x1xi32, #tpu.memory_space<vmem>>, vector<8x1xi32>
    %c0_i32 = arith.constant 0 : i32
    %27 = arith.index_cast %c0_i32 : i32 to index
    %c0_22 = arith.constant 0 : index
    %c0_23 = arith.constant 0 : index
    %28 = vector.load %arg11[%27, %c0_22, %c0_23] : memref<8x8x128xf32, #tpu.memory_space<vmem>>, vector<1x8x128xf32>
    %29 = vector.shape_cast %28 : vector<1x8x128xf32> to vector<8x128xf32>
    %30 = arith.truncf %10 : vector<8x128xf32> to vector<8x128xbf16>
    %cst_24 = arith.constant dense<0.000000e+00> : vector<8x128xf32>
    %31 = tpu.matmul %30, %24, %cst_24 {dimension_numbers = #tpu.dot_dimension_numbers<[1], [0], [0], [1], [0, 0, 1, 1], [], []>} : vector<8x128xbf16>, vector<128x128xbf16>, vector<8x128xf32> -> vector<8x128xf32>
    %32 = arith.addf %29, %31 : vector<8x128xf32>
    %33 = arith.negf %32 : vector<8x128xf32>
    %34 = math.exp %33 : vector<8x128xf32>
    %cst_25 = arith.constant 1.000000e+00 : f32
    %35 = vector.broadcast %cst_25 : f32 to vector<8x128xf32>
    %36 = arith.addf %35, %34 : vector<8x128xf32>
    %37 = arith.divf %35, %36 : vector<8x128xf32>
    %c108_i32 = arith.constant 108 : i32
    %38 = tpu.dynamic_rotate %37 by %c108_i32 dim 1 : vector<8x128xf32>, i32 -> vector<8x128xf32>
    %39 = vector.broadcast %25 : vector<1x128xf32> to vector<8x128xf32>
    %40 = arith.addf %31, %39 : vector<8x128xf32>
    %41 = arith.mulf %38, %40 : vector<8x128xf32>
    %42 = arith.addf %29, %41 : vector<8x128xf32>
    %43 = math.tanh %42 : vector<8x128xf32>
    %c108_i32_26 = arith.constant 108 : i32
    %44 = tpu.dynamic_rotate %43 by %c108_i32_26 dim 1 : vector<8x128xf32>, i32 -> vector<8x128xf32>
    %cst_27 = arith.constant 1.000000e+00 : f32
    %45 = vector.broadcast %cst_27 : f32 to vector<8x128xf32>
    %46 = arith.subf %45, %37 : vector<8x128xf32>
    %47 = arith.mulf %46, %44 : vector<8x128xf32>
    %48 = arith.mulf %37, %10 : vector<8x128xf32>
    %49 = arith.addf %47, %48 : vector<8x128xf32>
    %50 = vector.broadcast %c0_i32 : i32 to vector<8x1xi32>
    %51 = arith.cmpi sgt, %26, %50 : vector<8x1xi32>
    %52 = vector.shape_cast %51 : vector<8x1xi1> to vector<8x1xi1>
    %53 = vector.broadcast %52 : vector<8x1xi1> to vector<8x128xi1>
    %54 = arith.select %53, %49, %10 : vector<8x128xi1>, vector<8x128xf32>
    %c1_i32 = arith.constant 1 : i32
    %55 = arith.index_cast %c1_i32 : i32 to index
    %c0_28 = arith.constant 0 : index
    %c0_29 = arith.constant 0 : index
    %56 = vector.load %arg11[%55, %c0_28, %c0_29] : memref<8x8x128xf32, #tpu.memory_space<vmem>>, vector<1x8x128xf32>
    %57 = vector.shape_cast %56 : vector<1x8x128xf32> to vector<8x128xf32>
    %58 = arith.truncf %54 : vector<8x128xf32> to vector<8x128xbf16>
    %cst_30 = arith.constant dense<0.000000e+00> : vector<8x128xf32>
    %59 = tpu.matmul %58, %24, %cst_30 {dimension_numbers = #tpu.dot_dimension_numbers<[1], [0], [0], [1], [0, 0, 1, 1], [], []>} : vector<8x128xbf16>, vector<128x128xbf16>, vector<8x128xf32> -> vector<8x128xf32>
    %60 = arith.addf %57, %59 : vector<8x128xf32>
    %61 = arith.negf %60 : vector<8x128xf32>
    %62 = math.exp %61 : vector<8x128xf32>
    %cst_31 = arith.constant 1.000000e+00 : f32
    %63 = vector.broadcast %cst_31 : f32 to vector<8x128xf32>
    %64 = arith.addf %63, %62 : vector<8x128xf32>
    %65 = arith.divf %63, %64 : vector<8x128xf32>
    %c108_i32_32 = arith.constant 108 : i32
    %66 = tpu.dynamic_rotate %65 by %c108_i32_32 dim 1 : vector<8x128xf32>, i32 -> vector<8x128xf32>
    %67 = vector.broadcast %25 : vector<1x128xf32> to vector<8x128xf32>
    %68 = arith.addf %59, %67 : vector<8x128xf32>
    %69 = arith.mulf %66, %68 : vector<8x128xf32>
    %70 = arith.addf %57, %69 : vector<8x128xf32>
    %71 = math.tanh %70 : vector<8x128xf32>
    %c108_i32_33 = arith.constant 108 : i32
    %72 = tpu.dynamic_rotate %71 by %c108_i32_33 dim 1 : vector<8x128xf32>, i32 -> vector<8x128xf32>
    %cst_34 = arith.constant 1.000000e+00 : f32
    %73 = vector.broadcast %cst_34 : f32 to vector<8x128xf32>
    %74 = arith.subf %73, %65 : vector<8x128xf32>
    %75 = arith.mulf %74, %72 : vector<8x128xf32>
    %76 = arith.mulf %65, %54 : vector<8x128xf32>
    %77 = arith.addf %75, %76 : vector<8x128xf32>
    %78 = vector.broadcast %c1_i32 : i32 to vector<8x1xi32>
    %79 = arith.cmpi sgt, %26, %78 : vector<8x1xi32>
    %80 = vector.shape_cast %79 : vector<8x1xi1> to vector<8x1xi1>
    %81 = vector.broadcast %80 : vector<8x1xi1> to vector<8x128xi1>
    %82 = arith.select %81, %77, %54 : vector<8x128xi1>, vector<8x128xf32>
    %c2_i32 = arith.constant 2 : i32
    %83 = arith.index_cast %c2_i32 : i32 to index
    %c0_35 = arith.constant 0 : index
    %c0_36 = arith.constant 0 : index
    %84 = vector.load %arg11[%83, %c0_35, %c0_36] : memref<8x8x128xf32, #tpu.memory_space<vmem>>, vector<1x8x128xf32>
    %85 = vector.shape_cast %84 : vector<1x8x128xf32> to vector<8x128xf32>
    %86 = arith.truncf %82 : vector<8x128xf32> to vector<8x128xbf16>
    %cst_37 = arith.constant dense<0.000000e+00> : vector<8x128xf32>
    %87 = tpu.matmul %86, %24, %cst_37 {dimension_numbers = #tpu.dot_dimension_numbers<[1], [0], [0], [1], [0, 0, 1, 1], [], []>} : vector<8x128xbf16>, vector<128x128xbf16>, vector<8x128xf32> -> vector<8x128xf32>
    %88 = arith.addf %85, %87 : vector<8x128xf32>
    %89 = arith.negf %88 : vector<8x128xf32>
    %90 = math.exp %89 : vector<8x128xf32>
    %cst_38 = arith.constant 1.000000e+00 : f32
    %91 = vector.broadcast %cst_38 : f32 to vector<8x128xf32>
    %92 = arith.addf %91, %90 : vector<8x128xf32>
    %93 = arith.divf %91, %92 : vector<8x128xf32>
    %c108_i32_39 = arith.constant 108 : i32
    %94 = tpu.dynamic_rotate %93 by %c108_i32_39 dim 1 : vector<8x128xf32>, i32 -> vector<8x128xf32>
    %95 = vector.broadcast %25 : vector<1x128xf32> to vector<8x128xf32>
    %96 = arith.addf %87, %95 : vector<8x128xf32>
    %97 = arith.mulf %94, %96 : vector<8x128xf32>
    %98 = arith.addf %85, %97 : vector<8x128xf32>
    %99 = math.tanh %98 : vector<8x128xf32>
    %c108_i32_40 = arith.constant 108 : i32
    %100 = tpu.dynamic_rotate %99 by %c108_i32_40 dim 1 : vector<8x128xf32>, i32 -> vector<8x128xf32>
    %cst_41 = arith.constant 1.000000e+00 : f32
    %101 = vector.broadcast %cst_41 : f32 to vector<8x128xf32>
    %102 = arith.subf %101, %93 : vector<8x128xf32>
    %103 = arith.mulf %102, %100 : vector<8x128xf32>
    %104 = arith.mulf %93, %82 : vector<8x128xf32>
    %105 = arith.addf %103, %104 : vector<8x128xf32>
    %106 = vector.broadcast %c2_i32 : i32 to vector<8x1xi32>
    %107 = arith.cmpi sgt, %26, %106 : vector<8x1xi32>
    %108 = vector.shape_cast %107 : vector<8x1xi1> to vector<8x1xi1>
    %109 = vector.broadcast %108 : vector<8x1xi1> to vector<8x128xi1>
    %110 = arith.select %109, %105, %82 : vector<8x128xi1>, vector<8x128xf32>
    %c3_i32 = arith.constant 3 : i32
    %111 = arith.index_cast %c3_i32 : i32 to index
    %c0_42 = arith.constant 0 : index
    %c0_43 = arith.constant 0 : index
    %112 = vector.load %arg11[%111, %c0_42, %c0_43] : memref<8x8x128xf32, #tpu.memory_space<vmem>>, vector<1x8x128xf32>
    %113 = vector.shape_cast %112 : vector<1x8x128xf32> to vector<8x128xf32>
    %114 = arith.truncf %110 : vector<8x128xf32> to vector<8x128xbf16>
    %cst_44 = arith.constant dense<0.000000e+00> : vector<8x128xf32>
    %115 = tpu.matmul %114, %24, %cst_44 {dimension_numbers = #tpu.dot_dimension_numbers<[1], [0], [0], [1], [0, 0, 1, 1], [], []>} : vector<8x128xbf16>, vector<128x128xbf16>, vector<8x128xf32> -> vector<8x128xf32>
    %116 = arith.addf %113, %115 : vector<8x128xf32>
    %117 = arith.negf %116 : vector<8x128xf32>
    %118 = math.exp %117 : vector<8x128xf32>
    %cst_45 = arith.constant 1.000000e+00 : f32
    %119 = vector.broadcast %cst_45 : f32 to vector<8x128xf32>
    %120 = arith.addf %119, %118 : vector<8x128xf32>
    %121 = arith.divf %119, %120 : vector<8x128xf32>
    %c108_i32_46 = arith.constant 108 : i32
    %122 = tpu.dynamic_rotate %121 by %c108_i32_46 dim 1 : vector<8x128xf32>, i32 -> vector<8x128xf32>
    %123 = vector.broadcast %25 : vector<1x128xf32> to vector<8x128xf32>
    %124 = arith.addf %115, %123 : vector<8x128xf32>
    %125 = arith.mulf %122, %124 : vector<8x128xf32>
    %126 = arith.addf %113, %125 : vector<8x128xf32>
    %127 = math.tanh %126 : vector<8x128xf32>
    %c108_i32_47 = arith.constant 108 : i32
    %128 = tpu.dynamic_rotate %127 by %c108_i32_47 dim 1 : vector<8x128xf32>, i32 -> vector<8x128xf32>
    %cst_48 = arith.constant 1.000000e+00 : f32
    %129 = vector.broadcast %cst_48 : f32 to vector<8x128xf32>
    %130 = arith.subf %129, %121 : vector<8x128xf32>
    %131 = arith.mulf %130, %128 : vector<8x128xf32>
    %132 = arith.mulf %121, %110 : vector<8x128xf32>
    %133 = arith.addf %131, %132 : vector<8x128xf32>
    %134 = vector.broadcast %c3_i32 : i32 to vector<8x1xi32>
    %135 = arith.cmpi sgt, %26, %134 : vector<8x1xi32>
    %136 = vector.shape_cast %135 : vector<8x1xi1> to vector<8x1xi1>
    %137 = vector.broadcast %136 : vector<8x1xi1> to vector<8x128xi1>
    %138 = arith.select %137, %133, %110 : vector<8x128xi1>, vector<8x128xf32>
    %c4_i32 = arith.constant 4 : i32
    %139 = arith.index_cast %c4_i32 : i32 to index
    %c0_49 = arith.constant 0 : index
    %c0_50 = arith.constant 0 : index
    %140 = vector.load %arg11[%139, %c0_49, %c0_50] : memref<8x8x128xf32, #tpu.memory_space<vmem>>, vector<1x8x128xf32>
    %141 = vector.shape_cast %140 : vector<1x8x128xf32> to vector<8x128xf32>
    %142 = arith.truncf %138 : vector<8x128xf32> to vector<8x128xbf16>
    %cst_51 = arith.constant dense<0.000000e+00> : vector<8x128xf32>
    %143 = tpu.matmul %142, %24, %cst_51 {dimension_numbers = #tpu.dot_dimension_numbers<[1], [0], [0], [1], [0, 0, 1, 1], [], []>} : vector<8x128xbf16>, vector<128x128xbf16>, vector<8x128xf32> -> vector<8x128xf32>
    %144 = arith.addf %141, %143 : vector<8x128xf32>
    %145 = arith.negf %144 : vector<8x128xf32>
    %146 = math.exp %145 : vector<8x128xf32>
    %cst_52 = arith.constant 1.000000e+00 : f32
    %147 = vector.broadcast %cst_52 : f32 to vector<8x128xf32>
    %148 = arith.addf %147, %146 : vector<8x128xf32>
    %149 = arith.divf %147, %148 : vector<8x128xf32>
    %c108_i32_53 = arith.constant 108 : i32
    %150 = tpu.dynamic_rotate %149 by %c108_i32_53 dim 1 : vector<8x128xf32>, i32 -> vector<8x128xf32>
    %151 = vector.broadcast %25 : vector<1x128xf32> to vector<8x128xf32>
    %152 = arith.addf %143, %151 : vector<8x128xf32>
    %153 = arith.mulf %150, %152 : vector<8x128xf32>
    %154 = arith.addf %141, %153 : vector<8x128xf32>
    %155 = math.tanh %154 : vector<8x128xf32>
    %c108_i32_54 = arith.constant 108 : i32
    %156 = tpu.dynamic_rotate %155 by %c108_i32_54 dim 1 : vector<8x128xf32>, i32 -> vector<8x128xf32>
    %cst_55 = arith.constant 1.000000e+00 : f32
    %157 = vector.broadcast %cst_55 : f32 to vector<8x128xf32>
    %158 = arith.subf %157, %149 : vector<8x128xf32>
    %159 = arith.mulf %158, %156 : vector<8x128xf32>
    %160 = arith.mulf %149, %138 : vector<8x128xf32>
    %161 = arith.addf %159, %160 : vector<8x128xf32>
    %162 = vector.broadcast %c4_i32 : i32 to vector<8x1xi32>
    %163 = arith.cmpi sgt, %26, %162 : vector<8x1xi32>
    %164 = vector.shape_cast %163 : vector<8x1xi1> to vector<8x1xi1>
    %165 = vector.broadcast %164 : vector<8x1xi1> to vector<8x128xi1>
    %166 = arith.select %165, %161, %138 : vector<8x128xi1>, vector<8x128xf32>
    %c5_i32 = arith.constant 5 : i32
    %167 = arith.index_cast %c5_i32 : i32 to index
    %c0_56 = arith.constant 0 : index
    %c0_57 = arith.constant 0 : index
    %168 = vector.load %arg11[%167, %c0_56, %c0_57] : memref<8x8x128xf32, #tpu.memory_space<vmem>>, vector<1x8x128xf32>
    %169 = vector.shape_cast %168 : vector<1x8x128xf32> to vector<8x128xf32>
    %170 = arith.truncf %166 : vector<8x128xf32> to vector<8x128xbf16>
    %cst_58 = arith.constant dense<0.000000e+00> : vector<8x128xf32>
    %171 = tpu.matmul %170, %24, %cst_58 {dimension_numbers = #tpu.dot_dimension_numbers<[1], [0], [0], [1], [0, 0, 1, 1], [], []>} : vector<8x128xbf16>, vector<128x128xbf16>, vector<8x128xf32> -> vector<8x128xf32>
    %172 = arith.addf %169, %171 : vector<8x128xf32>
    %173 = arith.negf %172 : vector<8x128xf32>
    %174 = math.exp %173 : vector<8x128xf32>
    %cst_59 = arith.constant 1.000000e+00 : f32
    %175 = vector.broadcast %cst_59 : f32 to vector<8x128xf32>
    %176 = arith.addf %175, %174 : vector<8x128xf32>
    %177 = arith.divf %175, %176 : vector<8x128xf32>
    %c108_i32_60 = arith.constant 108 : i32
    %178 = tpu.dynamic_rotate %177 by %c108_i32_60 dim 1 : vector<8x128xf32>, i32 -> vector<8x128xf32>
    %179 = vector.broadcast %25 : vector<1x128xf32> to vector<8x128xf32>
    %180 = arith.addf %171, %179 : vector<8x128xf32>
    %181 = arith.mulf %178, %180 : vector<8x128xf32>
    %182 = arith.addf %169, %181 : vector<8x128xf32>
    %183 = math.tanh %182 : vector<8x128xf32>
    %c108_i32_61 = arith.constant 108 : i32
    %184 = tpu.dynamic_rotate %183 by %c108_i32_61 dim 1 : vector<8x128xf32>, i32 -> vector<8x128xf32>
    %cst_62 = arith.constant 1.000000e+00 : f32
    %185 = vector.broadcast %cst_62 : f32 to vector<8x128xf32>
    %186 = arith.subf %185, %177 : vector<8x128xf32>
    %187 = arith.mulf %186, %184 : vector<8x128xf32>
    %188 = arith.mulf %177, %166 : vector<8x128xf32>
    %189 = arith.addf %187, %188 : vector<8x128xf32>
    %190 = vector.broadcast %c5_i32 : i32 to vector<8x1xi32>
    %191 = arith.cmpi sgt, %26, %190 : vector<8x1xi32>
    %192 = vector.shape_cast %191 : vector<8x1xi1> to vector<8x1xi1>
    %193 = vector.broadcast %192 : vector<8x1xi1> to vector<8x128xi1>
    %194 = arith.select %193, %189, %166 : vector<8x128xi1>, vector<8x128xf32>
    %c6_i32 = arith.constant 6 : i32
    %195 = arith.index_cast %c6_i32 : i32 to index
    %c0_63 = arith.constant 0 : index
    %c0_64 = arith.constant 0 : index
    %196 = vector.load %arg11[%195, %c0_63, %c0_64] : memref<8x8x128xf32, #tpu.memory_space<vmem>>, vector<1x8x128xf32>
    %197 = vector.shape_cast %196 : vector<1x8x128xf32> to vector<8x128xf32>
    %198 = arith.truncf %194 : vector<8x128xf32> to vector<8x128xbf16>
    %cst_65 = arith.constant dense<0.000000e+00> : vector<8x128xf32>
    %199 = tpu.matmul %198, %24, %cst_65 {dimension_numbers = #tpu.dot_dimension_numbers<[1], [0], [0], [1], [0, 0, 1, 1], [], []>} : vector<8x128xbf16>, vector<128x128xbf16>, vector<8x128xf32> -> vector<8x128xf32>
    %200 = arith.addf %197, %199 : vector<8x128xf32>
    %201 = arith.negf %200 : vector<8x128xf32>
    %202 = math.exp %201 : vector<8x128xf32>
    %cst_66 = arith.constant 1.000000e+00 : f32
    %203 = vector.broadcast %cst_66 : f32 to vector<8x128xf32>
    %204 = arith.addf %203, %202 : vector<8x128xf32>
    %205 = arith.divf %203, %204 : vector<8x128xf32>
    %c108_i32_67 = arith.constant 108 : i32
    %206 = tpu.dynamic_rotate %205 by %c108_i32_67 dim 1 : vector<8x128xf32>, i32 -> vector<8x128xf32>
    %207 = vector.broadcast %25 : vector<1x128xf32> to vector<8x128xf32>
    %208 = arith.addf %199, %207 : vector<8x128xf32>
    %209 = arith.mulf %206, %208 : vector<8x128xf32>
    %210 = arith.addf %197, %209 : vector<8x128xf32>
    %211 = math.tanh %210 : vector<8x128xf32>
    %c108_i32_68 = arith.constant 108 : i32
    %212 = tpu.dynamic_rotate %211 by %c108_i32_68 dim 1 : vector<8x128xf32>, i32 -> vector<8x128xf32>
    %cst_69 = arith.constant 1.000000e+00 : f32
    %213 = vector.broadcast %cst_69 : f32 to vector<8x128xf32>
    %214 = arith.subf %213, %205 : vector<8x128xf32>
    %215 = arith.mulf %214, %212 : vector<8x128xf32>
    %216 = arith.mulf %205, %194 : vector<8x128xf32>
    %217 = arith.addf %215, %216 : vector<8x128xf32>
    %218 = vector.broadcast %c6_i32 : i32 to vector<8x1xi32>
    %219 = arith.cmpi sgt, %26, %218 : vector<8x1xi32>
    %220 = vector.shape_cast %219 : vector<8x1xi1> to vector<8x1xi1>
    %221 = vector.broadcast %220 : vector<8x1xi1> to vector<8x128xi1>
    %222 = arith.select %221, %217, %194 : vector<8x128xi1>, vector<8x128xf32>
    %c7_i32 = arith.constant 7 : i32
    %223 = arith.index_cast %c7_i32 : i32 to index
    %c0_70 = arith.constant 0 : index
    %c0_71 = arith.constant 0 : index
    %224 = vector.load %arg11[%223, %c0_70, %c0_71] : memref<8x8x128xf32, #tpu.memory_space<vmem>>, vector<1x8x128xf32>
    %225 = vector.shape_cast %224 : vector<1x8x128xf32> to vector<8x128xf32>
    %226 = arith.truncf %222 : vector<8x128xf32> to vector<8x128xbf16>
    %cst_72 = arith.constant dense<0.000000e+00> : vector<8x128xf32>
    %227 = tpu.matmul %226, %24, %cst_72 {dimension_numbers = #tpu.dot_dimension_numbers<[1], [0], [0], [1], [0, 0, 1, 1], [], []>} : vector<8x128xbf16>, vector<128x128xbf16>, vector<8x128xf32> -> vector<8x128xf32>
    %228 = arith.addf %225, %227 : vector<8x128xf32>
    %229 = arith.negf %228 : vector<8x128xf32>
    %230 = math.exp %229 : vector<8x128xf32>
    %cst_73 = arith.constant 1.000000e+00 : f32
    %231 = vector.broadcast %cst_73 : f32 to vector<8x128xf32>
    %232 = arith.addf %231, %230 : vector<8x128xf32>
    %233 = arith.divf %231, %232 : vector<8x128xf32>
    %c108_i32_74 = arith.constant 108 : i32
    %234 = tpu.dynamic_rotate %233 by %c108_i32_74 dim 1 : vector<8x128xf32>, i32 -> vector<8x128xf32>
    %235 = vector.broadcast %25 : vector<1x128xf32> to vector<8x128xf32>
    %236 = arith.addf %227, %235 : vector<8x128xf32>
    %237 = arith.mulf %234, %236 : vector<8x128xf32>
    %238 = arith.addf %225, %237 : vector<8x128xf32>
    %239 = math.tanh %238 : vector<8x128xf32>
    %c108_i32_75 = arith.constant 108 : i32
    %240 = tpu.dynamic_rotate %239 by %c108_i32_75 dim 1 : vector<8x128xf32>, i32 -> vector<8x128xf32>
    %cst_76 = arith.constant 1.000000e+00 : f32
    %241 = vector.broadcast %cst_76 : f32 to vector<8x128xf32>
    %242 = arith.subf %241, %233 : vector<8x128xf32>
    %243 = arith.mulf %242, %240 : vector<8x128xf32>
    %244 = arith.mulf %233, %222 : vector<8x128xf32>
    %245 = arith.addf %243, %244 : vector<8x128xf32>
    %246 = vector.broadcast %c7_i32 : i32 to vector<8x1xi32>
    %247 = arith.cmpi sgt, %26, %246 : vector<8x1xi32>
    %248 = vector.shape_cast %247 : vector<8x1xi1> to vector<8x1xi1>
    %249 = vector.broadcast %248 : vector<8x1xi1> to vector<8x128xi1>
    %250 = arith.select %249, %245, %222 : vector<8x128xi1>, vector<8x128xf32>
    %c8_i32 = arith.constant 8 : i32
    %c0_77 = arith.constant 0 : index
    %c0_78 = arith.constant 0 : index
    %251 = vector.load %arg10[%c0_77, %c0_78] : memref<8x128xf32, #tpu.memory_space<vmem>>, vector<8x128xf32>
    tpu.vector_store %arg10[%c0_77, %c0_78], %250 {strides = array<i32>} : memref<8x128xf32, #tpu.memory_space<vmem>>, vector<8x128xf32>,
    return
  }
  func.func @transform_0(%arg0: i32) -> (i32, i32, i32) {
    %c0_i32 = arith.constant 0 : i32
    %c0_i32_0 = arith.constant 0 : i32
    %c0_i32_1 = arith.constant 0 : i32
    return %c0_i32, %arg0, %c0_i32_0 : i32, i32, i32
  }
  func.func @transform_1(%arg0: i32) -> (i32, i32) {
    %c0_i32 = arith.constant 0 : i32
    %c0_i32_0 = arith.constant 0 : i32
    return %arg0, %c0_i32 : i32, i32
  }
  func.func @transform_2(%arg0: i32) -> (i32, i32) {
    %c0_i32 = arith.constant 0 : i32
    %c0_i32_0 = arith.constant 0 : i32
    return %arg0, %c0_i32 : i32, i32
  }
  func.func @transform_3(%arg0: i32) -> (i32, i32) {
    %c0_i32 = arith.constant 0 : i32
    %c0_i32_0 = arith.constant 0 : i32
    %c0_i32_1 = arith.constant 0 : i32
    return %c0_i32, %c0_i32_0 : i32, i32
  }
  func.func @transform_4(%arg0: i32) -> (i32, i32) {
    %c0_i32 = arith.constant 0 : i32
    %c0_i32_0 = arith.constant 0 : i32
    %c0_i32_1 = arith.constant 0 : i32
    return %c0_i32, %c0_i32_0 : i32, i32
  }
  func.func @transform_5(%arg0: i32) -> (i32, i32) {
    %c0_i32 = arith.constant 0 : i32
    %c0_i32_0 = arith.constant 0 : i32
    %c0_i32_1 = arith.constant 0 : i32
    return %c0_i32, %c0_i32_0 : i32, i32
  }
  func.func @transform_6(%arg0: i32) -> (i32, i32) {
    %c0_i32 = arith.constant 0 : i32
    %c0_i32_0 = arith.constant 0 : i32
    %c0_i32_1 = arith.constant 0 : i32
    return %c0_i32, %c0_i32_0 : i32, i32
  }
  func.func @transform_7(%arg0: i32) -> (i32, i32) {
    %c0_i32 = arith.constant 0 : i32
    %c0_i32_0 = arith.constant 0 : i32
    %c0_i32_1 = arith.constant 0 : i32
    return %c0_i32, %c0_i32_0 : i32, i32
  }
  func.func @transform_8(%arg0: i32) -> (i32, i32) {
    %c0_i32 = arith.constant 0 : i32
    %c0_i32_0 = arith.constant 0 : i32
    %c0_i32_1 = arith.constant 0 : i32
    return %c0_i32, %c0_i32_0 : i32, i32
  }
  func.func @transform_9(%arg0: i32) -> (i32, i32) {
    %c0_i32 = arith.constant 0 : i32
    %c0_i32_0 = arith.constant 0 : i32
    return %arg0, %c0_i32 : i32, i32
  }
}

</mosaic_0001>

<llo_original>
// kernel: tpu_custom_call.1
$region0: #{tpu_custom_call.1}
  #allocation0 [shape = 'u32[]', space=smem, size = 0x4, offset = 0x4, fixed_abs, tag = 'smem constant byte address 0x4 - core index']
  #allocation1 [shape = 'u32[144,128]{1,0:T(1,128)}', space=vmem, size = 0x12000, scoped, tag = 'internal scratch']
  #allocation2 [shape = 'f32[8,8,128]{2,1,0:T(8,128)}', space=vmem, size = 0x8000, scoped, tag = 'scratch operand']
  %s0 = inlined_call_operand.vmem [shape: bf16[8,8,1], index: 0, kind: input, shape index: {}]
  %s1 = inlined_call_operand.vmem [shape: s32[8,1], index: 1, kind: input, shape index: {}]
  %s2 = inlined_call_operand.vmem [shape: bf16[8,128], index: 2, kind: input, shape index: {}]
  %s3 = inlined_call_operand.hbm [shape: bf16[128,128], index: 3, kind: input, shape index: {}]
  %s4 = inlined_call_operand.vmem [shape: f32[1,128], index: 4, kind: input, shape index: {}]
  %s5 = inlined_call_operand.vmem [shape: bf16[1,128], index: 5, kind: input, shape index: {}]
  %s6 = inlined_call_operand.vmem [shape: f32[1,128], index: 6, kind: input, shape index: {}]
  %s7 = inlined_call_operand.vmem [shape: bf16[128,128], index: 7, kind: input, shape index: {}]
  %s8 = inlined_call_operand.vmem [shape: f32[1,128], index: 8, kind: input, shape index: {}]
  %s9 = inlined_call_operand.hbm [shape: f32[8,128], index: 9, kind: output, shape index: {}]
  %s10 = sld [smem:[#allocation0]]
  $region50: #{tpu_custom_call.1} parent=0
    _
  %s12 = ssub.s32 1, %s10
  %s13 = scalar_select 0, %s12, %s10
  $region1: #{tpu_custom_call.1} parent=0
    #allocation3 [shape = 'u8[32768]{0}', space=vmem, size = 0x8000, scoped, tag = 'input window, operand 3, single buffered']
    #allocation4 [shape = 's32[1]{0}', space=sflag, size = 0x4, scoped, tag = 'scoped memory for tpu_custom_call.1']
    #allocation5 [shape = 's32[1]{0}', space=sflag, size = 0x4, scoped, tag = 'scoped memory for tpu_custom_call.1']
    #allocation6 [shape = 'u8[4096]{0}', space=vmem, size = 0x1000, scoped, tag = 'output window, operand 0, single buffered']
    %14 = vsyncpa [#allocation4], 0
    %15 = vsyncpa [#allocation5], 0
    // Predicated region
    $region2: #{tpu_custom_call.1} parent=1 // pred_check
      _
    $region3: #{tpu_custom_call.1} parent=1 // pred_check_branch
      %17 = sbr.rel (0) target = $region5
    $region4: #{tpu_custom_call.1} parent=1 // pred_region
      _
    $region5: #{tpu_custom_call.1} parent=1 // pred_fallthru
      _
    // Predicated region
    $region6: #{tpu_custom_call.1} parent=1 // pred_check
      _
    $region7: #{tpu_custom_call.1} parent=1 // pred_check_branch
      %19 = sbr.rel (0) target = $region9
    $region8: #{tpu_custom_call.1} parent=1 // pred_region
      _
    $region9: #{tpu_custom_call.1} parent=1 // pred_fallthru
      _
    // Predicated region
    $region10: #{tpu_custom_call.1} parent=1 // pred_check
      _
    $region11: #{tpu_custom_call.1} parent=1 // pred_check_branch
      %21 = sbr.rel (0) target = $region13
    $region12: #{tpu_custom_call.1} parent=1 // pred_region
      _
    $region13: #{tpu_custom_call.1} parent=1 // pred_fallthru
      _
    // Predicated region
    $region14: #{tpu_custom_call.1} parent=1 // pred_check
      _
    $region15: #{tpu_custom_call.1} parent=1 // pred_check_branch
      %23 = sbr.rel (0) target = $region17
    $region16: #{tpu_custom_call.1} parent=1 // pred_region
      %s25 = ssub.s32 1024, 1024
      %26 = vsyncadd [#allocation4], %s25
      %s27 = sshll.u32 [#allocation3], 4
      %s28 = int_to_ptr.vmem [resolvable:$true] %s27
      %33 = dma.hbm_to_vmem [thread:$0]  %s3, 1024, %s28, [#allocation4], 64, 64, 4
    $region17: #{tpu_custom_call.1} parent=1 // pred_fallthru
      _
    // Predicated region
    $region18: #{tpu_custom_call.1} parent=1 // pred_check
      _
    $region19: #{tpu_custom_call.1} parent=1 // pred_check_branch
      %35 = sbr.rel (0) target = $region21
    $region20: #{tpu_custom_call.1} parent=1 // pred_region
      _
    $region21: #{tpu_custom_call.1} parent=1 // pred_fallthru
      _
    // Predicated region
    $region22: #{tpu_custom_call.1} parent=1 // pred_check
      _
    $region23: #{tpu_custom_call.1} parent=1 // pred_check_branch
      %37 = sbr.rel (0) target = $region25
    $region24: #{tpu_custom_call.1} parent=1 // pred_region
      _
    $region25: #{tpu_custom_call.1} parent=1 // pred_fallthru
      _
    // Predicated region
    $region26: #{tpu_custom_call.1} parent=1 // pred_check
      _
    $region27: #{tpu_custom_call.1} parent=1 // pred_check_branch
      %39 = sbr.rel (0) target = $region29
    $region28: #{tpu_custom_call.1} parent=1 // pred_region
      _
    $region29: #{tpu_custom_call.1} parent=1 // pred_fallthru
      _
    // Predicated region
    $region30: #{tpu_custom_call.1} parent=1 // pred_check
      _
    $region31: #{tpu_custom_call.1} parent=1 // pred_check_branch
      %41 = sbr.rel (0) target = $region33
    $region32: #{tpu_custom_call.1} parent=1 // pred_region
      _
    $region33: #{tpu_custom_call.1} parent=1 // pred_fallthru
      _
    // Predicated region
    $region34: #{tpu_custom_call.1} parent=1 // pred_check
      _
    $region35: #{tpu_custom_call.1} parent=1 // pred_check_branch
      %43 = sbr.rel (0) target = $region37
    $region36: #{tpu_custom_call.1} parent=1 // pred_region
      _
    $region37: #{tpu_custom_call.1} parent=1 // pred_fallthru
      _
    // Predicated region
    $region38: #{tpu_custom_call.1} parent=1 // pred_check
      _
    $region39: #{tpu_custom_call.1} parent=1 // pred_check_branch
      %45 = sbr.rel (0) target = $region41
    $region40: #{tpu_custom_call.1} parent=1 // pred_region
      %46 = dma.done [#allocation4], 1024
    $region41: #{tpu_custom_call.1} parent=1 // pred_fallthru
      _
    %v48 = vld [vmem:[%s2] sm:$0xf]
    %v49 = vld [vmem:[#allocation3] sm:$0xf]
    %v50 = vld [vmem:[#allocation3 + $0x4] sm:$0xf]
    %v51 = vld [vmem:[#allocation3 + $0x8] sm:$0xf]
    %v52 = vld [vmem:[#allocation3 + $0xc] sm:$0xf]
    %v53 = vld [vmem:[#allocation3 + $0x10] sm:$0xf]
    %v54 = vld [vmem:[#allocation3 + $0x14] sm:$0xf]
    %v55 = vld [vmem:[#allocation3 + $0x18] sm:$0xf]
    %v56 = vld [vmem:[#allocation3 + $0x1c] sm:$0xf]
    %v57 = vld [vmem:[#allocation3 + $0x20] sm:$0xf]
    %v58 = vld [vmem:[#allocation3 + $0x24] sm:$0xf]
    %v59 = vld [vmem:[#allocation3 + $0x28] sm:$0xf]
    %v60 = vld [vmem:[#allocation3 + $0x2c] sm:$0xf]
    %v61 = vld [vmem:[#allocation3 + $0x30] sm:$0xf]
    %v62 = vld [vmem:[#allocation3 + $0x34] sm:$0xf]
    %v63 = vld [vmem:[#allocation3 + $0x38] sm:$0xf]
    %v64 = vld [vmem:[#allocation3 + $0x3c] sm:$0xf]
    %v65 = vld [vmem:[%s4] sm:$0x1]
    %v67 = vlaneseq
    %v68 = vshrl.u32 %v67, 7
    %v69 = vsub.s32 0, %v68
    %v70 = vrot.slane %v65, %v69
    %v88 = vunpack.c.l.b16 %v49
    %v89 = vunpack.c.l.b16 %v50
    %v90 = vunpack.c.l.b16 %v51
    %v91 = vunpack.c.l.b16 %v52
    %v92 = vunpack.c.l.b16 %v53
    %v93 = vunpack.c.l.b16 %v54
    %v94 = vunpack.c.l.b16 %v55
    %v95 = vunpack.c.l.b16 %v56
    %v96 = vunpack.c.l.b16 %v57
    %v97 = vunpack.c.l.b16 %v58
    %v98 = vunpack.c.l.b16 %v59
    %v99 = vunpack.c.l.b16 %v60
    %v100 = vunpack.c.l.b16 %v61
    %v101 = vunpack.c.l.b16 %v62
    %v102 = vunpack.c.l.b16 %v63
    %v103 = vunpack.c.l.b16 %v64
    %v104 = vpack.c.b16 %v89, %v88
    %v105 = vpack.c.b16 %v91, %v90
    %v106 = vpack.c.b16 %v93, %v92
    %v107 = vpack.c.b16 %v95, %v94
    %v108 = vpack.c.b16 %v97, %v96
    %v109 = vpack.c.b16 %v99, %v98
    %v110 = vpack.c.b16 %v101, %v100
    %v111 = vpack.c.b16 %v103, %v102
    %120 = vmatprep.subr.bf16.mxu0 0
    %121 = vmatpush1.bf16.msra.mxu0 %v104
    %122 = vmatprep.subr.bf16.mxu0 0
    %123 = vmatpush1.bf16.msra.mxu0 %v105
    %124 = vmatprep.subr.bf16.mxu0 0
    %125 = vmatpush1.bf16.msra.mxu0 %v106
    %126 = vmatprep.subr.bf16.mxu0 0
    %127 = vmatpush1.bf16.msra.mxu0 %v107
    %128 = vmatprep.subr.bf16.mxu0 0
    %129 = vmatpush1.bf16.msra.mxu0 %v108
    %130 = vmatprep.subr.bf16.mxu0 0
    %131 = vmatpush1.bf16.msra.mxu0 %v109
    %132 = vmatprep.subr.bf16.mxu0 0
    %133 = vmatpush1.bf16.msra.mxu0 %v110
    %134 = vmatprep.subr.bf16.mxu0 0
    %135 = vmatpush1.bf16.msra.mxu0 %v111
    %136 = vmatprep.subr.bf16.mxu0 0
    %137 = vmatpush1.bf16.msra.mxu0 0
    %138 = vmatprep.subr.bf16.mxu0 0
    %139 = vmatpush1.bf16.msra.mxu0 0
    %140 = vmatprep.subr.bf16.mxu0 0
    %141 = vmatpush1.bf16.msra.mxu0 0
    %142 = vmatprep.subr.bf16.mxu0 0
    %143 = vmatpush1.bf16.msra.mxu0 0
    %144 = vmatprep.subr.bf16.mxu0 0
    %145 = vmatpush1.bf16.msra.mxu0 0
    %146 = vmatprep.subr.bf16.mxu0 0
    %147 = vmatpush1.bf16.msra.mxu0 0
    %148 = vmatprep.subr.bf16.mxu0 0
    %149 = vmatpush1.bf16.msra.mxu0 0
    %150 = vmatprep.subr.bf16.mxu0 0
    %151 = vmatpush1.bf16.msra.mxu0 0
    %152 = vmatprep.mubr.bf16.mxu0 0
    %153 = vmatmul.mubr.bf16.gmra.mrb[0].mxu0 %v48
    %v154 = vpop.f32.mrb[0].mxu0
    %v155 = vadd.f32 %v70, %v154
    %v156 = vpop.f32.mrb[0].mxu0
    %v157 = vpop.f32.mrb[0].mxu0
    %v158 = vpop.f32.mrb[0].mxu0
    %159 = vdwg.mxu0
    %v160 = vxor.u32 %v155, 2147483648
    %v161 = vmul.f32 %v160, 1.442695
    %v162 = vpow.pop %v161
    %v163 = vadd.f32 %v162, 1.0
    %v164 = vrcp.pop %v163
    %v165 = vmul.f32 1.0, %v164
    %v166 = vld [vmem:[%s0] sm:$0xf]
    %v167 = vld [vmem:[%s0 + $0x4] sm:$0xf]
    %v168 = vld [vmem:[%s0 + $0x8] sm:$0xf]
    %v169 = vld [vmem:[%s0 + $0xc] sm:$0xf]
    %v170 = vld [vmem:[%s0 + $0x10] sm:$0xf]
    %v171 = vld [vmem:[%s0 + $0x14] sm:$0xf]
    %v172 = vld [vmem:[%s0 + $0x18] sm:$0xf]
    %v173 = vld [vmem:[%s0 + $0x1c] sm:$0xf]
    %v174 = vunpack.c.l.bf16 %v166
    %v175 = vunpack.c.l.bf16 %v167
    %v176 = vunpack.c.l.bf16 %v168
    %v177 = vunpack.c.l.bf16 %v169
    %v178 = vunpack.c.l.bf16 %v170
    %v179 = vunpack.c.l.bf16 %v171
    %v180 = vunpack.c.l.bf16 %v172
    %v181 = vunpack.c.l.bf16 %v173
    %v182 = vld [vmem:[%s5] sm:$0x1]
    %v183 = vunpack.c.l.bf16 %v182
    %185 = vset.pattern.permute.xlu0 0
    %186 = vperm.xlu0 %185, %v174
    %v187 = vpop.permute.xlu0 %186
    %190 = vset.pattern.permute.xlu0 0
    %191 = vperm.xlu0 %190, %v175
    %v192 = vpop.permute.xlu0 %191
    %195 = vset.pattern.permute.xlu0 0
    %196 = vperm.xlu0 %195, %v176
    %v197 = vpop.permute.xlu0 %196
    %200 = vset.pattern.permute.xlu0 0
    %201 = vperm.xlu0 %200, %v177
    %v202 = vpop.permute.xlu0 %201
    %205 = vset.pattern.permute.xlu0 0
    %206 = vperm.xlu0 %205, %v178
    %v207 = vpop.permute.xlu0 %206
    %210 = vset.pattern.permute.xlu0 0
    %211 = vperm.xlu0 %210, %v179
    %v212 = vpop.permute.xlu0 %211
    %215 = vset.pattern.permute.xlu0 0
    %216 = vperm.xlu0 %215, %v180
    %v217 = vpop.permute.xlu0 %216
    %220 = vset.pattern.permute.xlu0 0
    %221 = vperm.xlu0 %220, %v181
    %v222 = vpop.permute.xlu0 %221
    %v224 = vlaneseq
    %v225 = vshrl.u32 %v224, 7
    %v226 = vsub.s32 0, %v225
    %v227 = vrot.slane %v183, %v226
    %v228 = vmul.f32 %v187, %v227
    %v229 = vmul.f32 %v192, %v227
    %v230 = vmul.f32 %v197, %v227
    %v231 = vmul.f32 %v202, %v227
    %v232 = vmul.f32 %v207, %v227
    %v233 = vmul.f32 %v212, %v227
    %v234 = vmul.f32 %v217, %v227
    %v235 = vmul.f32 %v222, %v227
    %v236 = vld [vmem:[%s6] sm:$0x1]
    %v238 = vlaneseq
    %v239 = vshrl.u32 %v238, 7
    %v240 = vsub.s32 0, %v239
    %v241 = vrot.slane %v236, %v240
    %v243 = vadd.f32 %v228, %v241
    %v244 = vadd.f32 %v229, %v241
    %v245 = vadd.f32 %v230, %v241
    %v246 = vadd.f32 %v231, %v241
    %v247 = vadd.f32 %v232, %v241
    %v248 = vadd.f32 %v233, %v241
    %v249 = vadd.f32 %v234, %v241
    %v250 = vadd.f32 %v235, %v241
    %251 = vst [vmem:[#allocation2] sm:$0xff] %v243
    %252 = vst [vmem:[#allocation2 + $0x8] sm:$0xff] %v244
    %253 = vst [vmem:[#allocation2 + $0x10] sm:$0xff] %v245
    %254 = vst [vmem:[#allocation2 + $0x18] sm:$0xff] %v246
    %255 = vst [vmem:[#allocation2 + $0x20] sm:$0xff] %v247
    %256 = vst [vmem:[#allocation2 + $0x28] sm:$0xff] %v248
    %257 = vst [vmem:[#allocation2 + $0x30] sm:$0xff] %v249
    %258 = vst [vmem:[#allocation2 + $0x38] sm:$0xff] %v250
    %v259 = vld [vmem:[%s7] sm:$0xf]
    %v260 = vld [vmem:[%s7 + $0x4] sm:$0xf]
    %v261 = vld [vmem:[%s7 + $0x8] sm:$0xf]
    %v262 = vld [vmem:[%s7 + $0xc] sm:$0xf]
    %v263 = vld [vmem:[%s7 + $0x10] sm:$0xf]
    %v264 = vld [vmem:[%s7 + $0x14] sm:$0xf]
    %v265 = vld [vmem:[%s7 + $0x18] sm:$0xf]
    %v266 = vld [vmem:[%s7 + $0x1c] sm:$0xf]
    %v267 = vld [vmem:[%s7 + $0x20] sm:$0xf]
    %v268 = vld [vmem:[%s7 + $0x24] sm:$0xf]
    %v269 = vld [vmem:[%s7 + $0x28] sm:$0xf]
    %v270 = vld [vmem:[%s7 + $0x2c] sm:$0xf]
    %v271 = vld [vmem:[%s7 + $0x30] sm:$0xf]
    %v272 = vld [vmem:[%s7 + $0x34] sm:$0xf]
    %v273 = vld [vmem:[%s7 + $0x38] sm:$0xf]
    %v274 = vld [vmem:[%s7 + $0x3c] sm:$0xf]
    %v275 = vld [vmem:[%s8] sm:$0x1]
    %v276 = vld [vmem:[%s1] sm:$0xff]
    %v277 = vld [vmem:[#allocation2] sm:$0xff]
    %v278 = vpack.c.bf16 %v165, %v165
    %v295 = vunpack.c.l.b16 %v259
    %v296 = vunpack.c.l.b16 %v260
    %v297 = vunpack.c.l.b16 %v261
    %v298 = vunpack.c.l.b16 %v262
    %v299 = vunpack.c.l.b16 %v263
    %v300 = vunpack.c.l.b16 %v264
    %v301 = vunpack.c.l.b16 %v265
    %v302 = vunpack.c.l.b16 %v266
    %v303 = vunpack.c.l.b16 %v267
    %v304 = vunpack.c.l.b16 %v268
    %v305 = vunpack.c.l.b16 %v269
    %v306 = vunpack.c.l.b16 %v270
    %v307 = vunpack.c.l.b16 %v271
    %v308 = vunpack.c.l.b16 %v272
    %v309 = vunpack.c.l.b16 %v273
    %v310 = vunpack.c.l.b16 %v274
    %v311 = vpack.c.b16 %v296, %v295
    %v312 = vpack.c.b16 %v298, %v297
    %v313 = vpack.c.b16 %v300, %v299
    %v314 = vpack.c.b16 %v302, %v301
    %v315 = vpack.c.b16 %v304, %v303
    %v316 = vpack.c.b16 %v306, %v305
    %v317 = vpack.c.b16 %v308, %v307
    %v318 = vpack.c.b16 %v310, %v309
    %327 = vmatprep.subr.bf16.mxu0 0
    %328 = vmatpush1.bf16.msra.mxu0 %v311
    %329 = vmatprep.subr.bf16.mxu0 0
    %330 = vmatpush1.bf16.msra.mxu0 %v312
    %331 = vmatprep.subr.bf16.mxu0 0
    %332 = vmatpush1.bf16.msra.mxu0 %v313
    %333 = vmatprep.subr.bf16.mxu0 0
    %334 = vmatpush1.bf16.msra.mxu0 %v314
    %335 = vmatprep.subr.bf16.mxu0 0
    %336 = vmatpush1.bf16.msra.mxu0 %v315
    %337 = vmatprep.subr.bf16.mxu0 0
    %338 = vmatpush1.bf16.msra.mxu0 %v316
    %339 = vmatprep.subr.bf16.mxu0 0
    %340 = vmatpush1.bf16.msra.mxu0 %v317
    %341 = vmatprep.subr.bf16.mxu0 0
    %342 = vmatpush1.bf16.msra.mxu0 %v318
    %343 = vmatprep.subr.bf16.mxu0 0
    %344 = vmatpush1.bf16.msra.mxu0 0
    %345 = vmatprep.subr.bf16.mxu0 0
    %346 = vmatpush1.bf16.msra.mxu0 0
    %347 = vmatprep.subr.bf16.mxu0 0
    %348 = vmatpush1.bf16.msra.mxu0 0
    %349 = vmatprep.subr.bf16.mxu0 0
    %350 = vmatpush1.bf16.msra.mxu0 0
    %351 = vmatprep.subr.bf16.mxu0 0
    %352 = vmatpush1.bf16.msra.mxu0 0
    %353 = vmatprep.subr.bf16.mxu0 0
    %354 = vmatpush1.bf16.msra.mxu0 0
    %355 = vmatprep.subr.bf16.mxu0 0
    %356 = vmatpush1.bf16.msra.mxu0 0
    %357 = vmatprep.subr.bf16.mxu0 0
    %358 = vmatpush1.bf16.msra.mxu0 0
    %359 = vmatprep.mubr.bf16.mxu0 0
    %360 = vmatmul.mubr.bf16.gmra.mrb[0].mxu0 %v278
    %v361 = vpop.f32.mrb[0].mxu0
    %v362 = vadd.f32 0.0, %v361
    %v363 = vpop.f32.mrb[0].mxu0
    %v364 = vpop.f32.mrb[0].mxu0
    %v365 = vpop.f32.mrb[0].mxu0
    %366 = vdwg.mxu0
    %v367 = vadd.f32 %v277, %v362
    %v368 = vxor.u32 %v367, 2147483648
    %v369 = vmul.f32 %v368, 1.442695
    %v370 = vpow.pop %v369
    %v371 = vadd.f32 %v370, 1.0
    %v372 = vrcp.pop %v371
    %v373 = vmul.f32 1.0, %v372
    %374 = vrot.lane.b32.xlu0 %v373, 108
    %v375 = vpop.permute.xlu0 %374
    %v377 = vlaneseq
    %v378 = vshrl.u32 %v377, 7
    %v379 = vsub.s32 0, %v378
    %v380 = vrot.slane %v275, %v379
    %v382 = vadd.f32 %v362, %v380
    %v383 = vmul.f32 %v375, %v382
    %v384 = vadd.f32 %v277, %v383
    %v385 = vtanh.pop %v384
    %386 = vrot.lane.b32.xlu0 %v385, 108
    %v387 = vpop.permute.xlu0 %386
    %v388 = vsub.f32 1.0, %v373
    %v389 = vmul.f32 %v388, %v387
    %v390 = vmul.f32 %v373, %v165
    %v391 = vadd.f32 %v389, %v390
    %vm392 = vcmp.gt.s32.totalorder %v276, 0
    %v393 = vsel %vm392, 1, 0
    %394 = vset.pattern.permute.xlu0 0
    %395 = vperm.xlu0 %394, %v393
    %v396 = vpop.permute.xlu0 %395
    %vm397 = vcmp.eq.s32.totalorder %v396, 1
    %v398 = vsel %vm397, %v391, %v165
    %s399 = scalar_lea.vmem [#allocation2], 8
    %v400 = vld [vmem:[%s399] sm:$0xff]
    %v401 = vpack.c.bf16 %v398, %v398
    %402 = vmatprep.subr.bf16.mxu0 0
    %403 = vmatpush1.bf16.msra.mxu0 %v311
    %404 = vmatprep.subr.bf16.mxu0 0
    %405 = vmatpush1.bf16.msra.mxu0 %v312
    %406 = vmatprep.subr.bf16.mxu0 0
    %407 = vmatpush1.bf16.msra.mxu0 %v313
    %408 = vmatprep.subr.bf16.mxu0 0
    %409 = vmatpush1.bf16.msra.mxu0 %v314
    %410 = vmatprep.subr.bf16.mxu0 0
    %411 = vmatpush1.bf16.msra.mxu0 %v315
    %412 = vmatprep.subr.bf16.mxu0 0
    %413 = vmatpush1.bf16.msra.mxu0 %v316
    %414 = vmatprep.subr.bf16.mxu0 0
    %415 = vmatpush1.bf16.msra.mxu0 %v317
    %416 = vmatprep.subr.bf16.mxu0 0
    %417 = vmatpush1.bf16.msra.mxu0 %v318
    %418 = vmatprep.subr.bf16.mxu0 0
    %419 = vmatpush1.bf16.msra.mxu0 0
    %420 = vmatprep.subr.bf16.mxu0 0
    %421 = vmatpush1.bf16.msra.mxu0 0
    %422 = vmatprep.subr.bf16.mxu0 0
    %423 = vmatpush1.bf16.msra.mxu0 0
    %424 = vmatprep.subr.bf16.mxu0 0
    %425 = vmatpush1.bf16.msra.mxu0 0
    %426 = vmatprep.subr.bf16.mxu0 0
    %427 = vmatpush1.bf16.msra.mxu0 0
    %428 = vmatprep.subr.bf16.mxu0 0
    %429 = vmatpush1.bf16.msra.mxu0 0
    %430 = vmatprep.subr.bf16.mxu0 0
    %431 = vmatpush1.bf16.msra.mxu0 0
    %432 = vmatprep.subr.bf16.mxu0 0
    %433 = vmatpush1.bf16.msra.mxu0 0
    %434 = vmatprep.mubr.bf16.mxu0 0
    %435 = vmatmul.mubr.bf16.gmra.mrb[0].mxu0 %v401
    %v436 = vpop.f32.mrb[0].mxu0
    %v437 = vadd.f32 0.0, %v436
    %v438 = vpop.f32.mrb[0].mxu0
    %v439 = vpop.f32.mrb[0].mxu0
    %v440 = vpop.f32.mrb[0].mxu0
    %441 = vdwg.mxu0
    %v442 = vadd.f32 %v400, %v437
    %v443 = vxor.u32 %v442, 2147483648
    %v444 = vmul.f32 %v443, 1.442695
    %v445 = vpow.pop %v444
    %v446 = vadd.f32 %v445, 1.0
    %v447 = vrcp.pop %v446
    %v448 = vmul.f32 1.0, %v447
    %449 = vrot.lane.b32.xlu0 %v448, 108
    %v450 = vpop.permute.xlu0 %449
    %v451 = vadd.f32 %v437, %v380
    %v452 = vmul.f32 %v450, %v451
    %v453 = vadd.f32 %v400, %v452
    %v454 = vtanh.pop %v453
    %455 = vrot.lane.b32.xlu0 %v454, 108
    %v456 = vpop.permute.xlu0 %455
    %v457 = vsub.f32 1.0, %v448
    %v458 = vmul.f32 %v457, %v456
    %v459 = vmul.f32 %v448, %v398
    %v460 = vadd.f32 %v458, %v459
    %vm461 = vcmp.gt.s32.totalorder %v276, 1
    %v462 = vsel %vm461, 1, 0
    %463 = vset.pattern.permute.xlu0 0
    %464 = vperm.xlu0 %463, %v462
    %v465 = vpop.permute.xlu0 %464
    %vm466 = vcmp.eq.s32.totalorder %v465, 1
    %v467 = vsel %vm466, %v460, %v398
    %s468 = scalar_lea.vmem [#allocation2], 16
    %v469 = vld [vmem:[%s468] sm:$0xff]
    %v470 = vpack.c.bf16 %v467, %v467
    %471 = vmatprep.subr.bf16.mxu0 0
    %472 = vmatpush1.bf16.msra.mxu0 %v311
    %473 = vmatprep.subr.bf16.mxu0 0
    %474 = vmatpush1.bf16.msra.mxu0 %v312
    %475 = vmatprep.subr.bf16.mxu0 0
    %476 = vmatpush1.bf16.msra.mxu0 %v313
    %477 = vmatprep.subr.bf16.mxu0 0
    %478 = vmatpush1.bf16.msra.mxu0 %v314
    %479 = vmatprep.subr.bf16.mxu0 0
    %480 = vmatpush1.bf16.msra.mxu0 %v315
    %481 = vmatprep.subr.bf16.mxu0 0
    %482 = vmatpush1.bf16.msra.mxu0 %v316
    %483 = vmatprep.subr.bf16.mxu0 0
    %484 = vmatpush1.bf16.msra.mxu0 %v317
    %485 = vmatprep.subr.bf16.mxu0 0
    %486 = vmatpush1.bf16.msra.mxu0 %v318
    %487 = vmatprep.subr.bf16.mxu0 0
    %488 = vmatpush1.bf16.msra.mxu0 0
    %489 = vmatprep.subr.bf16.mxu0 0
    %490 = vmatpush1.bf16.msra.mxu0 0
    %491 = vmatprep.subr.bf16.mxu0 0
    %492 = vmatpush1.bf16.msra.mxu0 0
    %493 = vmatprep.subr.bf16.mxu0 0
    %494 = vmatpush1.bf16.msra.mxu0 0
    %495 = vmatprep.subr.bf16.mxu0 0
    %496 = vmatpush1.bf16.msra.mxu0 0
    %497 = vmatprep.subr.bf16.mxu0 0
    %498 = vmatpush1.bf16.msra.mxu0 0
    %499 = vmatprep.subr.bf16.mxu0 0
    %500 = vmatpush1.bf16.msra.mxu0 0
    %501 = vmatprep.subr.bf16.mxu0 0
    %502 = vmatpush1.bf16.msra.mxu0 0
    %503 = vmatprep.mubr.bf16.mxu0 0
    %504 = vmatmul.mubr.bf16.gmra.mrb[0].mxu0 %v470
    %v505 = vpop.f32.mrb[0].mxu0
    %v506 = vadd.f32 0.0, %v505
    %v507 = vpop.f32.mrb[0].mxu0
    %v508 = vpop.f32.mrb[0].mxu0
    %v509 = vpop.f32.mrb[0].mxu0
    %510 = vdwg.mxu0
    %v511 = vadd.f32 %v469, %v506
    %v512 = vxor.u32 %v511, 2147483648
    %v513 = vmul.f32 %v512, 1.442695
    %v514 = vpow.pop %v513
    %v515 = vadd.f32 %v514, 1.0
    %v516 = vrcp.pop %v515
    %v517 = vmul.f32 1.0, %v516
    %518 = vrot.lane.b32.xlu0 %v517, 108
    %v519 = vpop.permute.xlu0 %518
    %v520 = vadd.f32 %v506, %v380
    %v521 = vmul.f32 %v519, %v520
    %v522 = vadd.f32 %v469, %v521
    %v523 = vtanh.pop %v522
    %524 = vrot.lane.b32.xlu0 %v523, 108
    %v525 = vpop.permute.xlu0 %524
    %v526 = vsub.f32 1.0, %v517
    %v527 = vmul.f32 %v526, %v525
    %v528 = vmul.f32 %v517, %v467
    %v529 = vadd.f32 %v527, %v528
    %vm530 = vcmp.gt.s32.totalorder %v276, 2
    %v531 = vsel %vm530, 1, 0
    %532 = vset.pattern.permute.xlu0 0
    %533 = vperm.xlu0 %532, %v531
    %v534 = vpop.permute.xlu0 %533
    %vm535 = vcmp.eq.s32.totalorder %v534, 1
    %v536 = vsel %vm535, %v529, %v467
    %s537 = scalar_lea.vmem [#allocation2], 24
    %v538 = vld [vmem:[%s537] sm:$0xff]
    %v539 = vpack.c.bf16 %v536, %v536
    %540 = vmatprep.subr.bf16.mxu0 0
    %541 = vmatpush1.bf16.msra.mxu0 %v311
    %542 = vmatprep.subr.bf16.mxu0 0
    %543 = vmatpush1.bf16.msra.mxu0 %v312
    %544 = vmatprep.subr.bf16.mxu0 0
    %545 = vmatpush1.bf16.msra.mxu0 %v313
    %546 = vmatprep.subr.bf16.mxu0 0
    %547 = vmatpush1.bf16.msra.mxu0 %v314
    %548 = vmatprep.subr.bf16.mxu0 0
    %549 = vmatpush1.bf16.msra.mxu0 %v315
    %550 = vmatprep.subr.bf16.mxu0 0
    %551 = vmatpush1.bf16.msra.mxu0 %v316
    %552 = vmatprep.subr.bf16.mxu0 0
    %553 = vmatpush1.bf16.msra.mxu0 %v317
    %554 = vmatprep.subr.bf16.mxu0 0
    %555 = vmatpush1.bf16.msra.mxu0 %v318
    %556 = vmatprep.subr.bf16.mxu0 0
    %557 = vmatpush1.bf16.msra.mxu0 0
    %558 = vmatprep.subr.bf16.mxu0 0
    %559 = vmatpush1.bf16.msra.mxu0 0
    %560 = vmatprep.subr.bf16.mxu0 0
    %561 = vmatpush1.bf16.msra.mxu0 0
    %562 = vmatprep.subr.bf16.mxu0 0
    %563 = vmatpush1.bf16.msra.mxu0 0
    %564 = vmatprep.subr.bf16.mxu0 0
    %565 = vmatpush1.bf16.msra.mxu0 0
    %566 = vmatprep.subr.bf16.mxu0 0
    %567 = vmatpush1.bf16.msra.mxu0 0
    %568 = vmatprep.subr.bf16.mxu0 0
    %569 = vmatpush1.bf16.msra.mxu0 0
    %570 = vmatprep.subr.bf16.mxu0 0
    %571 = vmatpush1.bf16.msra.mxu0 0
    %572 = vmatprep.mubr.bf16.mxu0 0
    %573 = vmatmul.mubr.bf16.gmra.mrb[0].mxu0 %v539
    %v574 = vpop.f32.mrb[0].mxu0
    %v575 = vadd.f32 0.0, %v574
    %v576 = vpop.f32.mrb[0].mxu0
    %v577 = vpop.f32.mrb[0].mxu0
    %v578 = vpop.f32.mrb[0].mxu0
    %579 = vdwg.mxu0
    %v580 = vadd.f32 %v538, %v575
    %v581 = vxor.u32 %v580, 2147483648
    %v582 = vmul.f32 %v581, 1.442695
    %v583 = vpow.pop %v582
    %v584 = vadd.f32 %v583, 1.0
    %v585 = vrcp.pop %v584
    %v586 = vmul.f32 1.0, %v585
    %587 = vrot.lane.b32.xlu0 %v586, 108
    %v588 = vpop.permute.xlu0 %587
    %v589 = vadd.f32 %v575, %v380
    %v590 = vmul.f32 %v588, %v589
    %v591 = vadd.f32 %v538, %v590
    %v592 = vtanh.pop %v591
    %593 = vrot.lane.b32.xlu0 %v592, 108
    %v594 = vpop.permute.xlu0 %593
    %v595 = vsub.f32 1.0, %v586
    %v596 = vmul.f32 %v595, %v594
    %v597 = vmul.f32 %v586, %v536
    %v598 = vadd.f32 %v596, %v597
    %vm599 = vcmp.gt.s32.totalorder %v276, 3
    %v600 = vsel %vm599, 1, 0
    %601 = vset.pattern.permute.xlu0 0
    %602 = vperm.xlu0 %601, %v600
    %v603 = vpop.permute.xlu0 %602
    %vm604 = vcmp.eq.s32.totalorder %v603, 1
    %v605 = vsel %vm604, %v598, %v536
    %s606 = scalar_lea.vmem [#allocation2], 32
    %v607 = vld [vmem:[%s606] sm:$0xff]
    %v608 = vpack.c.bf16 %v605, %v605
    %609 = vmatprep.subr.bf16.mxu0 0
    %610 = vmatpush1.bf16.msra.mxu0 %v311
    %611 = vmatprep.subr.bf16.mxu0 0
    %612 = vmatpush1.bf16.msra.mxu0 %v312
    %613 = vmatprep.subr.bf16.mxu0 0
    %614 = vmatpush1.bf16.msra.mxu0 %v313
    %615 = vmatprep.subr.bf16.mxu0 0
    %616 = vmatpush1.bf16.msra.mxu0 %v314
    %617 = vmatprep.subr.bf16.mxu0 0
    %618 = vmatpush1.bf16.msra.mxu0 %v315
    %619 = vmatprep.subr.bf16.mxu0 0
    %620 = vmatpush1.bf16.msra.mxu0 %v316
    %621 = vmatprep.subr.bf16.mxu0 0
    %622 = vmatpush1.bf16.msra.mxu0 %v317
    %623 = vmatprep.subr.bf16.mxu0 0
    %624 = vmatpush1.bf16.msra.mxu0 %v318
    %625 = vmatprep.subr.bf16.mxu0 0
    %626 = vmatpush1.bf16.msra.mxu0 0
    %627 = vmatprep.subr.bf16.mxu0 0
    %628 = vmatpush1.bf16.msra.mxu0 0
    %629 = vmatprep.subr.bf16.mxu0 0
    %630 = vmatpush1.bf16.msra.mxu0 0
    %631 = vmatprep.subr.bf16.mxu0 0
    %632 = vmatpush1.bf16.msra.mxu0 0
    %633 = vmatprep.subr.bf16.mxu0 0
    %634 = vmatpush1.bf16.msra.mxu0 0
    %635 = vmatprep.subr.bf16.mxu0 0
    %636 = vmatpush1.bf16.msra.mxu0 0
    %637 = vmatprep.subr.bf16.mxu0 0
    %638 = vmatpush1.bf16.msra.mxu0 0
    %639 = vmatprep.subr.bf16.mxu0 0
    %640 = vmatpush1.bf16.msra.mxu0 0
    %641 = vmatprep.mubr.bf16.mxu0 0
    %642 = vmatmul.mubr.bf16.gmra.mrb[0].mxu0 %v608
    %v643 = vpop.f32.mrb[0].mxu0
    %v644 = vadd.f32 0.0, %v643
    %v645 = vpop.f32.mrb[0].mxu0
    %v646 = vpop.f32.mrb[0].mxu0
    %v647 = vpop.f32.mrb[0].mxu0
    %648 = vdwg.mxu0
    %v649 = vadd.f32 %v607, %v644
    %v650 = vxor.u32 %v649, 2147483648
    %v651 = vmul.f32 %v650, 1.442695
    %v652 = vpow.pop %v651
    %v653 = vadd.f32 %v652, 1.0
    %v654 = vrcp.pop %v653
    %v655 = vmul.f32 1.0, %v654
    %656 = vrot.lane.b32.xlu0 %v655, 108
    %v657 = vpop.permute.xlu0 %656
    %v658 = vadd.f32 %v644, %v380
    %v659 = vmul.f32 %v657, %v658
    %v660 = vadd.f32 %v607, %v659
    %v661 = vtanh.pop %v660
    %662 = vrot.lane.b32.xlu0 %v661, 108
    %v663 = vpop.permute.xlu0 %662
    %v664 = vsub.f32 1.0, %v655
    %v665 = vmul.f32 %v664, %v663
    %v666 = vmul.f32 %v655, %v605
    %v667 = vadd.f32 %v665, %v666
    %vm668 = vcmp.gt.s32.totalorder %v276, 4
    %v669 = vsel %vm668, 1, 0
    %670 = vset.pattern.permute.xlu0 0
    %671 = vperm.xlu0 %670, %v669
    %v672 = vpop.permute.xlu0 %671
    %vm673 = vcmp.eq.s32.totalorder %v672, 1
    %v674 = vsel %vm673, %v667, %v605
    %s675 = scalar_lea.vmem [#allocation2], 40
    %v676 = vld [vmem:[%s675] sm:$0xff]
    %v677 = vpack.c.bf16 %v674, %v674
    %678 = vmatprep.subr.bf16.mxu0 0
    %679 = vmatpush1.bf16.msra.mxu0 %v311
    %680 = vmatprep.subr.bf16.mxu0 0
    %681 = vmatpush1.bf16.msra.mxu0 %v312
    %682 = vmatprep.subr.bf16.mxu0 0
    %683 = vmatpush1.bf16.msra.mxu0 %v313
    %684 = vmatprep.subr.bf16.mxu0 0
    %685 = vmatpush1.bf16.msra.mxu0 %v314
    %686 = vmatprep.subr.bf16.mxu0 0
    %687 = vmatpush1.bf16.msra.mxu0 %v315
    %688 = vmatprep.subr.bf16.mxu0 0
    %689 = vmatpush1.bf16.msra.mxu0 %v316
    %690 = vmatprep.subr.bf16.mxu0 0
    %691 = vmatpush1.bf16.msra.mxu0 %v317
    %692 = vmatprep.subr.bf16.mxu0 0
    %693 = vmatpush1.bf16.msra.mxu0 %v318
    %694 = vmatprep.subr.bf16.mxu0 0
    %695 = vmatpush1.bf16.msra.mxu0 0
    %696 = vmatprep.subr.bf16.mxu0 0
    %697 = vmatpush1.bf16.msra.mxu0 0
    %698 = vmatprep.subr.bf16.mxu0 0
    %699 = vmatpush1.bf16.msra.mxu0 0
    %700 = vmatprep.subr.bf16.mxu0 0
    %701 = vmatpush1.bf16.msra.mxu0 0
    %702 = vmatprep.subr.bf16.mxu0 0
    %703 = vmatpush1.bf16.msra.mxu0 0
    %704 = vmatprep.subr.bf16.mxu0 0
    %705 = vmatpush1.bf16.msra.mxu0 0
    %706 = vmatprep.subr.bf16.mxu0 0
    %707 = vmatpush1.bf16.msra.mxu0 0
    %708 = vmatprep.subr.bf16.mxu0 0
    %709 = vmatpush1.bf16.msra.mxu0 0
    %710 = vmatprep.mubr.bf16.mxu0 0
    %711 = vmatmul.mubr.bf16.gmra.mrb[0].mxu0 %v677
    %v712 = vpop.f32.mrb[0].mxu0
    %v713 = vadd.f32 0.0, %v712
    %v714 = vpop.f32.mrb[0].mxu0
    %v715 = vpop.f32.mrb[0].mxu0
    %v716 = vpop.f32.mrb[0].mxu0
    %717 = vdwg.mxu0
    %v718 = vadd.f32 %v676, %v713
    %v719 = vxor.u32 %v718, 2147483648
    %v720 = vmul.f32 %v719, 1.442695
    %v721 = vpow.pop %v720
    %v722 = vadd.f32 %v721, 1.0
    %v723 = vrcp.pop %v722
    %v724 = vmul.f32 1.0, %v723
    %725 = vrot.lane.b32.xlu0 %v724, 108
    %v726 = vpop.permute.xlu0 %725
    %v727 = vadd.f32 %v713, %v380
    %v728 = vmul.f32 %v726, %v727
    %v729 = vadd.f32 %v676, %v728
    %v730 = vtanh.pop %v729
    %731 = vrot.lane.b32.xlu0 %v730, 108
    %v732 = vpop.permute.xlu0 %731
    %v733 = vsub.f32 1.0, %v724
    %v734 = vmul.f32 %v733, %v732
    %v735 = vmul.f32 %v724, %v674
    %v736 = vadd.f32 %v734, %v735
    %vm737 = vcmp.gt.s32.totalorder %v276, 5
    %v738 = vsel %vm737, 1, 0
    %739 = vset.pattern.permute.xlu0 0
    %740 = vperm.xlu0 %739, %v738
    %v741 = vpop.permute.xlu0 %740
    %vm742 = vcmp.eq.s32.totalorder %v741, 1
    %v743 = vsel %vm742, %v736, %v674
    %s744 = scalar_lea.vmem [#allocation2], 48
    %v745 = vld [vmem:[%s744] sm:$0xff]
    %v746 = vpack.c.bf16 %v743, %v743
    %747 = vmatprep.subr.bf16.mxu0 0
    %748 = vmatpush1.bf16.msra.mxu0 %v311
    %749 = vmatprep.subr.bf16.mxu0 0
    %750 = vmatpush1.bf16.msra.mxu0 %v312
    %751 = vmatprep.subr.bf16.mxu0 0
    %752 = vmatpush1.bf16.msra.mxu0 %v313
    %753 = vmatprep.subr.bf16.mxu0 0
    %754 = vmatpush1.bf16.msra.mxu0 %v314
    %755 = vmatprep.subr.bf16.mxu0 0
    %756 = vmatpush1.bf16.msra.mxu0 %v315
    %757 = vmatprep.subr.bf16.mxu0 0
    %758 = vmatpush1.bf16.msra.mxu0 %v316
    %759 = vmatprep.subr.bf16.mxu0 0
    %760 = vmatpush1.bf16.msra.mxu0 %v317
    %761 = vmatprep.subr.bf16.mxu0 0
    %762 = vmatpush1.bf16.msra.mxu0 %v318
    %763 = vmatprep.subr.bf16.mxu0 0
    %764 = vmatpush1.bf16.msra.mxu0 0
    %765 = vmatprep.subr.bf16.mxu0 0
    %766 = vmatpush1.bf16.msra.mxu0 0
    %767 = vmatprep.subr.bf16.mxu0 0
    %768 = vmatpush1.bf16.msra.mxu0 0
    %769 = vmatprep.subr.bf16.mxu0 0
    %770 = vmatpush1.bf16.msra.mxu0 0
    %771 = vmatprep.subr.bf16.mxu0 0
    %772 = vmatpush1.bf16.msra.mxu0 0
    %773 = vmatprep.subr.bf16.mxu0 0
    %774 = vmatpush1.bf16.msra.mxu0 0
    %775 = vmatprep.subr.bf16.mxu0 0
    %776 = vmatpush1.bf16.msra.mxu0 0
    %777 = vmatprep.subr.bf16.mxu0 0
    %778 = vmatpush1.bf16.msra.mxu0 0
    %779 = vmatprep.mubr.bf16.mxu0 0
    %780 = vmatmul.mubr.bf16.gmra.mrb[0].mxu0 %v746
    %v781 = vpop.f32.mrb[0].mxu0
    %v782 = vadd.f32 0.0, %v781
    %v783 = vpop.f32.mrb[0].mxu0
    %v784 = vpop.f32.mrb[0].mxu0
    %v785 = vpop.f32.mrb[0].mxu0
    %786 = vdwg.mxu0
    %v787 = vadd.f32 %v745, %v782
    %v788 = vxor.u32 %v787, 2147483648
    %v789 = vmul.f32 %v788, 1.442695
    %v790 = vpow.pop %v789
    %v791 = vadd.f32 %v790, 1.0
    %v792 = vrcp.pop %v791
    %v793 = vmul.f32 1.0, %v792
    %794 = vrot.lane.b32.xlu0 %v793, 108
    %v795 = vpop.permute.xlu0 %794
    %v796 = vadd.f32 %v782, %v380
    %v797 = vmul.f32 %v795, %v796
    %v798 = vadd.f32 %v745, %v797
    %v799 = vtanh.pop %v798
    %800 = vrot.lane.b32.xlu0 %v799, 108
    %v801 = vpop.permute.xlu0 %800
    %v802 = vsub.f32 1.0, %v793
    %v803 = vmul.f32 %v802, %v801
    %v804 = vmul.f32 %v793, %v743
    %v805 = vadd.f32 %v803, %v804
    %vm806 = vcmp.gt.s32.totalorder %v276, 6
    %v807 = vsel %vm806, 1, 0
    %808 = vset.pattern.permute.xlu0 0
    %809 = vperm.xlu0 %808, %v807
    %v810 = vpop.permute.xlu0 %809
    %vm811 = vcmp.eq.s32.totalorder %v810, 1
    %v812 = vsel %vm811, %v805, %v743
    %s813 = scalar_lea.vmem [#allocation2], 56
    %v814 = vld [vmem:[%s813] sm:$0xff]
    %v815 = vpack.c.bf16 %v812, %v812
    %816 = vmatprep.subr.bf16.mxu0 0
    %817 = vmatpush1.bf16.msra.mxu0 %v311
    %818 = vmatprep.subr.bf16.mxu0 0
    %819 = vmatpush1.bf16.msra.mxu0 %v312
    %820 = vmatprep.subr.bf16.mxu0 0
    %821 = vmatpush1.bf16.msra.mxu0 %v313
    %822 = vmatprep.subr.bf16.mxu0 0
    %823 = vmatpush1.bf16.msra.mxu0 %v314
    %824 = vmatprep.subr.bf16.mxu0 0
    %825 = vmatpush1.bf16.msra.mxu0 %v315
    %826 = vmatprep.subr.bf16.mxu0 0
    %827 = vmatpush1.bf16.msra.mxu0 %v316
    %828 = vmatprep.subr.bf16.mxu0 0
    %829 = vmatpush1.bf16.msra.mxu0 %v317
    %830 = vmatprep.subr.bf16.mxu0 0
    %831 = vmatpush1.bf16.msra.mxu0 %v318
    %832 = vmatprep.subr.bf16.mxu0 0
    %833 = vmatpush1.bf16.msra.mxu0 0
    %834 = vmatprep.subr.bf16.mxu0 0
    %835 = vmatpush1.bf16.msra.mxu0 0
    %836 = vmatprep.subr.bf16.mxu0 0
    %837 = vmatpush1.bf16.msra.mxu0 0
    %838 = vmatprep.subr.bf16.mxu0 0
    %839 = vmatpush1.bf16.msra.mxu0 0
    %840 = vmatprep.subr.bf16.mxu0 0
    %841 = vmatpush1.bf16.msra.mxu0 0
    %842 = vmatprep.subr.bf16.mxu0 0
    %843 = vmatpush1.bf16.msra.mxu0 0
    %844 = vmatprep.subr.bf16.mxu0 0
    %845 = vmatpush1.bf16.msra.mxu0 0
    %846 = vmatprep.subr.bf16.mxu0 0
    %847 = vmatpush1.bf16.msra.mxu0 0
    %848 = vmatprep.mubr.bf16.mxu0 0
    %849 = vmatmul.mubr.bf16.gmra.mrb[0].mxu0 %v815
    %v850 = vpop.f32.mrb[0].mxu0
    %v851 = vadd.f32 0.0, %v850
    %v852 = vpop.f32.mrb[0].mxu0
    %v853 = vpop.f32.mrb[0].mxu0
    %v854 = vpop.f32.mrb[0].mxu0
    %855 = vdwg.mxu0
    %v856 = vadd.f32 %v814, %v851
    %v857 = vxor.u32 %v856, 2147483648
    %v858 = vmul.f32 %v857, 1.442695
    %v859 = vpow.pop %v858
    %v860 = vadd.f32 %v859, 1.0
    %v861 = vrcp.pop %v860
    %v862 = vmul.f32 1.0, %v861
    %863 = vrot.lane.b32.xlu0 %v862, 108
    %v864 = vpop.permute.xlu0 %863
    %v865 = vadd.f32 %v851, %v380
    %v866 = vmul.f32 %v864, %v865
    %v867 = vadd.f32 %v814, %v866
    %v868 = vtanh.pop %v867
    %869 = vrot.lane.b32.xlu0 %v868, 108
    %v870 = vpop.permute.xlu0 %869
    %v871 = vsub.f32 1.0, %v862
    %v872 = vmul.f32 %v871, %v870
    %v873 = vmul.f32 %v862, %v812
    %v874 = vadd.f32 %v872, %v873
    %vm875 = vcmp.gt.s32.totalorder %v276, 7
    %v876 = vsel %vm875, 1, 0
    %877 = vset.pattern.permute.xlu0 0
    %878 = vperm.xlu0 %877, %v876
    %v879 = vpop.permute.xlu0 %878
    %vm880 = vcmp.eq.s32.totalorder %v879, 1
    %v881 = vsel %vm880, %v874, %v812
    %882 = vst [vmem:[#allocation6] sm:$0xff] %v881
    // Predicated region
    $region42: #{tpu_custom_call.1} parent=1 // pred_check
      _
    $region43: #{tpu_custom_call.1} parent=1 // pred_check_branch
      %884 = sbr.rel (0) target = $region45
    $region44: #{tpu_custom_call.1} parent=1 // pred_region
      %s886 = ssub.s32 128, 128
      %887 = vsyncadd [#allocation5], %s886
      %s889 = sshll.u32 [#allocation6], 4
      %s890 = int_to_ptr.vmem [resolvable:$true] %s889
      %892 = dma.vmem_to_hbm [thread:$0]  %s890, 128, %s9, [#allocation5]
    $region45: #{tpu_custom_call.1} parent=1 // pred_fallthru
      _
    // Predicated region
    $region46: #{tpu_custom_call.1} parent=1 // pred_check
      _
    $region47: #{tpu_custom_call.1} parent=1 // pred_check_branch
      %894 = sbr.rel (0) target = $region49
    $region48: #{tpu_custom_call.1} parent=1 // pred_region
      %895 = dma.done [#allocation5], 128
    $region49: #{tpu_custom_call.1} parent=1 // pred_fallthru
      _
    %896 = vsyncpa [#allocation4], 1
    %897 = vsyncpa [#allocation5], 1

</llo_original>
